<compile_context>
chip_gen: v5e
topology: v5e:2x2
jax: 0.10.0
libtpu: 0.0.40
codegen_flags: <defaults>
</compile_context>

<pallas_src>
import functools

import jax
import jax.numpy as jnp
from jax import lax
from jax.experimental import pallas as pl
from jax.experimental.pallas import tpu as pltpu


# --------------------------------------------------------------------------- kernels
def _conv1_kernel(p_ref, w1_ref, b1_ref, h1_ref, s1_ref):
    """conv1 (single im2col matmul) for one batch tile + partial BN statistics."""
    p = p_ref[0]                                            # (L1, K*Cin)  bf16
    h = jnp.dot(p, w1_ref[...],
                preferred_element_type=jnp.float32)         # MXU bf16 x bf16 -> f32
    h = h + b1_ref[...]                                     # (L1, Cpad)   f32
    h1_ref[0] = h
    s = jnp.sum(h, axis=0, keepdims=True)                   # (1, Cpad)
    ss = jnp.sum(h * h, axis=0, keepdims=True)
    s1_ref[0] = jnp.concatenate([s, ss], axis=0)            # (2, Cpad)


def _bn1_conv2_kernel(h1_ref, s1_ref, w2_ref, b2_ref, g_ref, bt_ref,
                      h2_ref, s2_ref, *, rows, eps):
    """BN1 + ReLU (global stats) then conv2 for one batch tile + partial statistics."""
    h1 = h1_ref[0]                                          # (L1, Cpad) f32
    st = s1_ref[...]                                        # (2, Cpad)
    inv_n = 1.0 / rows
    mean = st[0:1, :] * inv_n
    var = st[1:2, :] * inv_n - mean * mean
    scale = lax.rsqrt(var + eps) * g_ref[...]
    a = jnp.maximum((h1 - mean) * scale + bt_ref[...], 0.0)  # (L1, Cpad)

    K = w2_ref.shape[0]
    L2 = h2_ref.shape[1]
    Cp = a.shape[1]
    zrow = jnp.zeros((1, Cp), jnp.float32)                  # conv2 padding = 1
    a_pad = jnp.concatenate([zrow, a, zrow], axis=0)        # (L1 + 2, Cpad)

    acc = jnp.zeros((L2, Cp), jnp.float32)
    for k in range(K):                                      # K full-tile MXU matmuls
        acc = acc + jnp.dot(a_pad[k:k + L2, :].astype(jnp.bfloat16), w2_ref[k],
                            preferred_element_type=jnp.float32)
    h2 = acc + b2_ref[...]                                  # bias broadcast once
    h2_ref[0] = h2
    s = jnp.sum(h2, axis=0, keepdims=True)
    ss = jnp.sum(h2 * h2, axis=0, keepdims=True)
    s2_ref[0] = jnp.concatenate([s, ss], axis=0)


def _bn2_relu_kernel(h2_ref, s2_ref, g_ref, bt_ref, o_ref, *, rows, eps):
    """BN2 + ReLU for one batch tile using globally reduced statistics."""
    h2 = h2_ref[0]
    st = s2_ref[...]
    inv_n = 1.0 / rows
    mean = st[0:1, :] * inv_n
    var = st[1:2, :] * inv_n - mean * mean
    scale = lax.rsqrt(var + eps) * g_ref[...]
    o_ref[0] = jnp.maximum((h2 - mean) * scale + bt_ref[...], 0.0)


# --------------------------------------------------------------------------- wrapper
def conv_block_pallas(x, w1, b1, w2, b2, gamma, beta, *, stride, eps=1e-5):
    """x: (N, Cin, L) f32; conv weights in PyTorch Conv1d layout (Cout, Cin, K)."""
    N, Cin, L = x.shape
    Cout, _, K = w1.shape
    pad = 1
    L1 = (L + 2 * pad - K) // stride + 1        # conv1 output length
    L2 = (L1 + 2 * pad - K) // 1 + 1            # conv2 output length (stride 1)
    Cp = max(128, -(-Cout // 128) * 128)        # lane-dense (multiple-of-128) channels

    # ---- layout glue (plain XLA): channels-last + K strided slices (no gather) ----
    x_cl = jnp.transpose(x, (0, 2, 1))                                   # (N, L, Cin)
    xp = jnp.pad(x_cl, ((0, 0), (pad, pad), (0, 0)))                     # (N, L+2, Cin)
    taps = [xp[:, k:k + (L1 - 1) * stride + 1:stride, :] for k in range(K)]
    patches = jnp.concatenate(taps, axis=-1).astype(jnp.bfloat16)        # (N, L1, K*Cin)

    w1m = (jnp.zeros((K * Cin, Cp), jnp.float32)
           .at[:, :Cout].set(w1.transpose(2, 1, 0).reshape(K * Cin, Cout))
           .astype(jnp.bfloat16))                                        # row = k*Cin + ci
    w2m = (jnp.zeros((K, Cp, Cp), jnp.float32)
           .at[:, :Cout, :Cout].set(w2.transpose(2, 1, 0))               # [k, ci, co]
           .astype(jnp.bfloat16))

    def cpad(v, fill):
        return jnp.full((1, Cp), fill, jnp.float32).at[0, :Cout].set(v)

    b1p, b2p = cpad(b1, 0.0), cpad(b2, 0.0)
    gp, btp = cpad(gamma, 1.0), cpad(beta, 0.0)

    # One batch per program: whole-batch tiles keep the conv row shifts tile-local.
    grid = (N,)
    cparams = pltpu.CompilerParams(dimension_semantics=("parallel",),
                                   vmem_limit_bytes=32 * 1024 * 1024)

    def row_spec(rows):
        return pl.BlockSpec((1, rows, Cp), lambda n: (n, 0, 0))

    vec_spec = pl.BlockSpec((1, Cp), lambda n: (0, 0))
    stat_out_spec = pl.BlockSpec((1, 2, Cp), lambda n: (n, 0, 0))
    stat_in_spec = pl.BlockSpec((2, Cp), lambda n: (0, 0))

    # ---- stage 1: conv1 + partial stats ----
    h1_pre, s1p = pl.pallas_call(
        _conv1_kernel,
        grid=grid,
        in_specs=[pl.BlockSpec((1, L1, K * Cin), lambda n: (n, 0, 0)),
                  pl.BlockSpec((K * Cin, Cp), lambda n: (0, 0)),
                  vec_spec],
        out_specs=(row_spec(L1), stat_out_spec),
        out_shape=(jax.ShapeDtypeStruct((N, L1, Cp), jnp.float32),
                   jax.ShapeDtypeStruct((N, 2, Cp), jnp.float32)),
        compiler_params=cparams,
    )(patches, w1m, b1p)
    stats1 = jnp.sum(s1p, axis=0)                                        # (2, Cp)

    # ---- stage 2: BN1 + ReLU + conv2 + partial stats ----
    h2_pre, s2p = pl.pallas_call(
        functools.partial(_bn1_conv2_kernel, rows=N * L1, eps=eps),
        grid=grid,
        in_specs=[row_spec(L1), stat_in_spec,
                  pl.BlockSpec((K, Cp, Cp), lambda n: (0, 0, 0)),
                  vec_spec, vec_spec, vec_spec],
        out_specs=(row_spec(L2), stat_out_spec),
        out_shape=(jax.ShapeDtypeStruct((N, L2, Cp), jnp.float32),
                   jax.ShapeDtypeStruct((N, 2, Cp), jnp.float32)),
        compiler_params=cparams,
    )(h1_pre, stats1, w2m, b2p, gp, btp)
    stats2 = jnp.sum(s2p, axis=0)

    # ---- stage 3: BN2 + ReLU ----
    out_p = pl.pallas_call(
        functools.partial(_bn2_relu_kernel, rows=N * L2, eps=eps),
        grid=grid,
        in_specs=[row_spec(L2), stat_in_spec, vec_spec, vec_spec],
        out_specs=row_spec(L2),
        out_shape=jax.ShapeDtypeStruct((N, L2, Cp), jnp.float32),
        compiler_params=cparams,
    )(h2_pre, stats2, gp, btp)

    return jnp.transpose(out_p[:, :, :Cout], (0, 2, 1))                  # back to NCL


# --------------------------------------------------------------------------- reference
def conv_block_ref(x, w1, b1, w2, b2, gamma, beta, *, stride, eps=1e-5):
    """Pure-JAX f32 reference mirroring the PyTorch forward (training-mode BN)."""
    def conv1d(h, w, b, s):
        y = lax.conv_general_dilated(h, w, window_strides=(s,), padding=[(1, 1)],
                                     dimension_numbers=('NCH', 'OIH', 'NCH'),
                                     precision=lax.Precision.HIGHEST)
        return y + b[None, :, None]

    def bn_relu(y):
        mean = jnp.mean(y, axis=(0, 2), keepdims=True)
        var = jnp.mean((y - mean) ** 2, axis=(0, 2), keepdims=True)
        yn = (y - mean) / jnp.sqrt(var + eps)
        yn = yn * gamma[None, :, None] + beta[None, :, None]
        return jnp.maximum(yn, 0.0)

    h = bn_relu(conv1d(x, w1, b1, stride))
    return bn_relu(conv1d(h, w2, b2, 1))


if __name__ == "__main__":
    # ConvolutionalBlock(4, 8, 3, 1) on (N=2, C=4, L=16)
    N, Cin, L = 2, 4, 16
    Cout, K, stride = 8, 3, 1

    key = jax.random.PRNGKey(0)
    ks = jax.random.split(key, 5)
    x = jax.random.normal(ks[0], (N, Cin, L), jnp.float32)

    # Deterministic parameter init (same shapes as nn.Conv1d / nn.BatchNorm1d).
    bound1 = 1.0 / jnp.sqrt(Cin * K)
    w1 = jax.random.uniform(ks[1], (Cout, Cin, K), jnp.float32, -1.0, 1.0) * bound1
    b1 = jax.random.uniform(ks[2], (Cout,), jnp.float32, -1.0, 1.0) * bound1
    bound2 = 1.0 / jnp.sqrt(Cout * K)
    w2 = jax.random.uniform(ks[3], (Cout, Cout, K), jnp.float32, -1.0, 1.0) * bound2
    b2 = jax.random.uniform(ks[4], (Cout,), jnp.float32, -1.0, 1.0) * bound2
    # Shared BatchNorm1d instance -> one (gamma, beta) pair used twice.
    gamma = jnp.ones((Cout,), jnp.float32)
    beta = jnp.zeros((Cout,), jnp.float32)

    fwd = jax.jit(functools.partial(conv_block_pallas, stride=stride))
    out = jax.block_until_ready(fwd(x, w1, b1, w2, b2, gamma, beta))
    ref = conv_block_ref(x, w1, b1, w2, b2, gamma, beta, stride=stride)

    assert out.shape == ref.shape, (out.shape, ref.shape)
    # Tolerance accounts for bf16 MXU operands (f32 accumulation) vs the f32-HIGHEST reference.
    if not jnp.allclose(out, ref, atol=3e-2, rtol=3e-2):
        err = float(jnp.max(jnp.abs(out - ref)))
        raise AssertionError(f"Pallas kernel output mismatch vs JAX reference (max |err|={err})")
    print("KERNEL_OK")
</pallas_src>

<mosaic_0001>
module attributes {stable_mosaic.version = 11 : i64} {
  func.func @_bn2_relu_kernel(%arg0: i32, %arg1: memref<1x16x128xf32, #tpu.memory_space<vmem>>, %arg2: memref<2x128xf32, #tpu.memory_space<vmem>>, %arg3: memref<1x128xf32, #tpu.memory_space<vmem>>, %arg4: memref<1x128xf32, #tpu.memory_space<vmem>>, %arg5: memref<1x16x128xf32, #tpu.memory_space<vmem>>) attributes {dimension_semantics = [#tpu.dimension_semantics<parallel>], iteration_bounds = array<i64: 2>, scalar_prefetch = 0 : i64, scratch_operands = 0 : i64, tpu.core_type = #tpu.core_type<tc>, window_params = [{transform_indices = @transform_0, window_bounds = array<i64: 1, 16, 128>}, {pipeline_mode = #tpu.pipeline_mode<synchronous>, transform_indices = @transform_1, window_bounds = array<i64: 2, 128>}, {pipeline_mode = #tpu.pipeline_mode<synchronous>, transform_indices = @transform_2, window_bounds = array<i64: 1, 128>}, {pipeline_mode = #tpu.pipeline_mode<synchronous>, transform_indices = @transform_3, window_bounds = array<i64: 1, 128>}, {transform_indices = @transform_4, window_bounds = array<i64: 1, 16, 128>}]} {
    %c0 = arith.constant 0 : index
    %c0_0 = arith.constant 0 : index
    %c0_1 = arith.constant 0 : index
    %0 = vector.load %arg1[%c0, %c0_0, %c0_1] : memref<1x16x128xf32, #tpu.memory_space<vmem>>, vector<1x16x128xf32>
    %1 = vector.shape_cast %0 : vector<1x16x128xf32> to vector<16x128xf32>
    %c0_2 = arith.constant 0 : index
    %c0_3 = arith.constant 0 : index
    %2 = vector.load %arg2[%c0_2, %c0_3] : memref<2x128xf32, #tpu.memory_space<vmem>>, vector<2x128xf32>
    %3 = vector.extract_strided_slice %2 {offsets = [0, 0], sizes = [1, 128], strides = [1, 1]} : vector<2x128xf32> to vector<1x128xf32>
    %cst = arith.constant 3.125000e-02 : f32
    %4 = vector.broadcast %cst : f32 to vector<1x128xf32>
    %5 = arith.mulf %3, %4 : vector<1x128xf32>
    %6 = vector.extract_strided_slice %2 {offsets = [1, 0], sizes = [1, 128], strides = [1, 1]} : vector<2x128xf32> to vector<1x128xf32>
    %cst_4 = arith.constant 3.125000e-02 : f32
    %7 = vector.broadcast %cst_4 : f32 to vector<1x128xf32>
    %8 = arith.mulf %6, %7 : vector<1x128xf32>
    %9 = arith.mulf %5, %5 : vector<1x128xf32>
    %10 = arith.subf %8, %9 : vector<1x128xf32>
    %cst_5 = arith.constant 9.99999974E-6 : f32
    %11 = vector.broadcast %cst_5 : f32 to vector<1x128xf32>
    %12 = arith.addf %10, %11 : vector<1x128xf32>
    %13 = math.rsqrt %12 : vector<1x128xf32>
    %c0_6 = arith.constant 0 : index
    %c0_7 = arith.constant 0 : index
    %14 = vector.load %arg3[%c0_6, %c0_7] : memref<1x128xf32, #tpu.memory_space<vmem>>, vector<1x128xf32>
    %15 = arith.mulf %13, %14 : vector<1x128xf32>
    %16 = vector.broadcast %5 : vector<1x128xf32> to vector<16x128xf32>
    %17 = arith.subf %1, %16 : vector<16x128xf32>
    %18 = vector.broadcast %15 : vector<1x128xf32> to vector<16x128xf32>
    %19 = arith.mulf %17, %18 : vector<16x128xf32>
    %c0_8 = arith.constant 0 : index
    %c0_9 = arith.constant 0 : index
    %20 = vector.load %arg4[%c0_8, %c0_9] : memref<1x128xf32, #tpu.memory_space<vmem>>, vector<1x128xf32>
    %21 = vector.broadcast %20 : vector<1x128xf32> to vector<16x128xf32>
    %22 = arith.addf %19, %21 : vector<16x128xf32>
    %cst_10 = arith.constant 0.000000e+00 : f32
    %23 = vector.broadcast %cst_10 : f32 to vector<16x128xf32>
    %24 = arith.maximumf %22, %23 : vector<16x128xf32>
    %c0_11 = arith.constant 0 : index
    %c0_12 = arith.constant 0 : index
    %c0_13 = arith.constant 0 : index
    %25 = vector.load %arg5[%c0_11, %c0_12, %c0_13] : memref<1x16x128xf32, #tpu.memory_space<vmem>>, vector<1x16x128xf32>
    %26 = vector.shape_cast %25 : vector<1x16x128xf32> to vector<16x128xf32>
    %27 = vector.shape_cast %24 : vector<16x128xf32> to vector<1x16x128xf32>
    tpu.vector_store %arg5[%c0_11, %c0_12, %c0_13], %27 {strides = array<i32>} : memref<1x16x128xf32, #tpu.memory_space<vmem>>, vector<1x16x128xf32>,
    return
  }
  func.func @transform_0(%arg0: i32) -> (i32, i32, i32) {
    %c0_i32 = arith.constant 0 : i32
    %c0_i32_0 = arith.constant 0 : i32
    %c0_i32_1 = arith.constant 0 : i32
    return %arg0, %c0_i32, %c0_i32_0 : i32, i32, i32
  }
  func.func @transform_1(%arg0: i32) -> (i32, i32) {
    %c0_i32 = arith.constant 0 : i32
    %c0_i32_0 = arith.constant 0 : i32
    %c0_i32_1 = arith.constant 0 : i32
    return %c0_i32, %c0_i32_0 : i32, i32
  }
  func.func @transform_2(%arg0: i32) -> (i32, i32) {
    %c0_i32 = arith.constant 0 : i32
    %c0_i32_0 = arith.constant 0 : i32
    %c0_i32_1 = arith.constant 0 : i32
    return %c0_i32, %c0_i32_0 : i32, i32
  }
  func.func @transform_3(%arg0: i32) -> (i32, i32) {
    %c0_i32 = arith.constant 0 : i32
    %c0_i32_0 = arith.constant 0 : i32
    %c0_i32_1 = arith.constant 0 : i32
    return %c0_i32, %c0_i32_0 : i32, i32
  }
  func.func @transform_4(%arg0: i32) -> (i32, i32, i32) {
    %c0_i32 = arith.constant 0 : i32
    %c0_i32_0 = arith.constant 0 : i32
    %c0_i32_1 = arith.constant 0 : i32
    return %arg0, %c0_i32, %c0_i32_0 : i32, i32, i32
  }
}

module attributes {stable_mosaic.version = 11 : i64} {
  func.func @_conv1_kernel(%arg0: i32, %arg1: memref<1x16x12xbf16, #tpu.memory_space<vmem>>, %arg2: memref<12x128xbf16, #tpu.memory_space<vmem>>, %arg3: memref<1x128xf32, #tpu.memory_space<vmem>>, %arg4: memref<1x16x128xf32, #tpu.memory_space<vmem>>, %arg5: memref<1x2x128xf32, #tpu.memory_space<vmem>>) attributes {dimension_semantics = [#tpu.dimension_semantics<parallel>], iteration_bounds = array<i64: 2>, scalar_prefetch = 0 : i64, scratch_operands = 0 : i64, tpu.core_type = #tpu.core_type<tc>, window_params = [{transform_indices = @transform_0, window_bounds = array<i64: 1, 16, 12>}, {pipeline_mode = #tpu.pipeline_mode<synchronous>, transform_indices = @transform_1, window_bounds = array<i64: 12, 128>}, {pipeline_mode = #tpu.pipeline_mode<synchronous>, transform_indices = @transform_2, window_bounds = array<i64: 1, 128>}, {transform_indices = @transform_3, window_bounds = array<i64: 1, 16, 128>}, {transform_indices = @transform_4, window_bounds = array<i64: 1, 2, 128>}]} {
    %c0 = arith.constant 0 : index
    %c0_0 = arith.constant 0 : index
    %c0_1 = arith.constant 0 : index
    %0 = vector.load %arg1[%c0, %c0_0, %c0_1] : memref<1x16x12xbf16, #tpu.memory_space<vmem>>, vector<1x16x12xbf16>
    %1 = vector.shape_cast %0 : vector<1x16x12xbf16> to vector<16x12xbf16>
    %c0_2 = arith.constant 0 : index
    %c0_3 = arith.constant 0 : index
    %2 = vector.load %arg2[%c0_2, %c0_3] : memref<12x128xbf16, #tpu.memory_space<vmem>>, vector<12x128xbf16>
    %cst = arith.constant dense<0.000000e+00> : vector<16x128xf32>
    %3 = tpu.matmul %1, %2, %cst {dimension_numbers = #tpu.dot_dimension_numbers<[1], [0], [0], [1], [0, 0, 1, 1], [], []>} : vector<16x12xbf16>, vector<12x128xbf16>, vector<16x128xf32> -> vector<16x128xf32>
    %c0_4 = arith.constant 0 : index
    %c0_5 = arith.constant 0 : index
    %4 = vector.load %arg3[%c0_4, %c0_5] : memref<1x128xf32, #tpu.memory_space<vmem>>, vector<1x128xf32>
    %5 = vector.broadcast %4 : vector<1x128xf32> to vector<16x128xf32>
    %6 = arith.addf %3, %5 : vector<16x128xf32>
    %c0_6 = arith.constant 0 : index
    %c0_7 = arith.constant 0 : index
    %c0_8 = arith.constant 0 : index
    %7 = vector.load %arg4[%c0_6, %c0_7, %c0_8] : memref<1x16x128xf32, #tpu.memory_space<vmem>>, vector<1x16x128xf32>
    %8 = vector.shape_cast %7 : vector<1x16x128xf32> to vector<16x128xf32>
    %9 = vector.shape_cast %6 : vector<16x128xf32> to vector<1x16x128xf32>
    tpu.vector_store %arg4[%c0_6, %c0_7, %c0_8], %9 {strides = array<i32>} : memref<1x16x128xf32, #tpu.memory_space<vmem>>, vector<1x16x128xf32>,
    %cst_9 = arith.constant dense<0.000000e+00> : vector<128xf32>
    %10 = vector.multi_reduction <add>, %6, %cst_9 [0] : vector<16x128xf32> to vector<128xf32>
    %11 = vector.shape_cast %10 : vector<128xf32> to vector<1x128xf32>
    %12 = arith.mulf %6, %6 : vector<16x128xf32>
    %cst_10 = arith.constant dense<0.000000e+00> : vector<128xf32>
    %13 = vector.multi_reduction <add>, %12, %cst_10 [0] : vector<16x128xf32> to vector<128xf32>
    %14 = vector.shape_cast %13 : vector<128xf32> to vector<1x128xf32>
    %15 = tpu.concatenate %11, %14 in 0 : vector<1x128xf32>, vector<1x128xf32> -> vector<2x128xf32>
    %c0_11 = arith.constant 0 : index
    %c0_12 = arith.constant 0 : index
    %c0_13 = arith.constant 0 : index
    %16 = vector.load %arg5[%c0_11, %c0_12, %c0_13] : memref<1x2x128xf32, #tpu.memory_space<vmem>>, vector<1x2x128xf32>
    %17 = vector.shape_cast %16 : vector<1x2x128xf32> to vector<2x128xf32>
    %18 = vector.shape_cast %15 : vector<2x128xf32> to vector<1x2x128xf32>
    tpu.vector_store %arg5[%c0_11, %c0_12, %c0_13], %18 {strides = array<i32>} : memref<1x2x128xf32, #tpu.memory_space<vmem>>, vector<1x2x128xf32>,
    return
  }
  func.func @transform_0(%arg0: i32) -> (i32, i32, i32) {
    %c0_i32 = arith.constant 0 : i32
    %c0_i32_0 = arith.constant 0 : i32
    %c0_i32_1 = arith.constant 0 : i32
    return %arg0, %c0_i32, %c0_i32_0 : i32, i32, i32
  }
  func.func @transform_1(%arg0: i32) -> (i32, i32) {
    %c0_i32 = arith.constant 0 : i32
    %c0_i32_0 = arith.constant 0 : i32
    %c0_i32_1 = arith.constant 0 : i32
    return %c0_i32, %c0_i32_0 : i32, i32
  }
  func.func @transform_2(%arg0: i32) -> (i32, i32) {
    %c0_i32 = arith.constant 0 : i32
    %c0_i32_0 = arith.constant 0 : i32
    %c0_i32_1 = arith.constant 0 : i32
    return %c0_i32, %c0_i32_0 : i32, i32
  }
  func.func @transform_3(%arg0: i32) -> (i32, i32, i32) {
    %c0_i32 = arith.constant 0 : i32
    %c0_i32_0 = arith.constant 0 : i32
    %c0_i32_1 = arith.constant 0 : i32
    return %arg0, %c0_i32, %c0_i32_0 : i32, i32, i32
  }
  func.func @transform_4(%arg0: i32) -> (i32, i32, i32) {
    %c0_i32 = arith.constant 0 : i32
    %c0_i32_0 = arith.constant 0 : i32
    %c0_i32_1 = arith.constant 0 : i32
    return %arg0, %c0_i32, %c0_i32_0 : i32, i32, i32
  }
}

module attributes {stable_mosaic.version = 11 : i64} {
  func.func @_bn1_conv2_kernel(%arg0: i32, %arg1: memref<1x16x128xf32, #tpu.memory_space<vmem>>, %arg2: memref<2x128xf32, #tpu.memory_space<vmem>>, %arg3: memref<3x128x128xbf16, #tpu.memory_space<vmem>>, %arg4: memref<1x128xf32, #tpu.memory_space<vmem>>, %arg5: memref<1x128xf32, #tpu.memory_space<vmem>>, %arg6: memref<1x128xf32, #tpu.memory_space<vmem>>, %arg7: memref<1x16x128xf32, #tpu.memory_space<vmem>>, %arg8: memref<1x2x128xf32, #tpu.memory_space<vmem>>) attributes {dimension_semantics = [#tpu.dimension_semantics<parallel>], iteration_bounds = array<i64: 2>, scalar_prefetch = 0 : i64, scratch_operands = 0 : i64, tpu.core_type = #tpu.core_type<tc>, window_params = [{transform_indices = @transform_0, window_bounds = array<i64: 1, 16, 128>}, {pipeline_mode = #tpu.pipeline_mode<synchronous>, transform_indices = @transform_1, window_bounds = array<i64: 2, 128>}, {pipeline_mode = #tpu.pipeline_mode<synchronous>, transform_indices = @transform_2, window_bounds = array<i64: 3, 128, 128>}, {pipeline_mode = #tpu.pipeline_mode<synchronous>, transform_indices = @transform_3, window_bounds = array<i64: 1, 128>}, {pipeline_mode = #tpu.pipeline_mode<synchronous>, transform_indices = @transform_4, window_bounds = array<i64: 1, 128>}, {pipeline_mode = #tpu.pipeline_mode<synchronous>, transform_indices = @transform_5, window_bounds = array<i64: 1, 128>}, {transform_indices = @transform_6, window_bounds = array<i64: 1, 16, 128>}, {transform_indices = @transform_7, window_bounds = array<i64: 1, 2, 128>}]} {
    %c0 = arith.constant 0 : index
    %c0_0 = arith.constant 0 : index
    %c0_1 = arith.constant 0 : index
    %0 = vector.load %arg1[%c0, %c0_0, %c0_1] : memref<1x16x128xf32, #tpu.memory_space<vmem>>, vector<1x16x128xf32>
    %1 = vector.shape_cast %0 : vector<1x16x128xf32> to vector<16x128xf32>
    %c0_2 = arith.constant 0 : index
    %c0_3 = arith.constant 0 : index
    %2 = vector.load %arg2[%c0_2, %c0_3] : memref<2x128xf32, #tpu.memory_space<vmem>>, vector<2x128xf32>
    %3 = vector.extract_strided_slice %2 {offsets = [0, 0], sizes = [1, 128], strides = [1, 1]} : vector<2x128xf32> to vector<1x128xf32>
    %cst = arith.constant 3.125000e-02 : f32
    %4 = vector.broadcast %cst : f32 to vector<1x128xf32>
    %5 = arith.mulf %3, %4 : vector<1x128xf32>
    %6 = vector.extract_strided_slice %2 {offsets = [1, 0], sizes = [1, 128], strides = [1, 1]} : vector<2x128xf32> to vector<1x128xf32>
    %cst_4 = arith.constant 3.125000e-02 : f32
    %7 = vector.broadcast %cst_4 : f32 to vector<1x128xf32>
    %8 = arith.mulf %6, %7 : vector<1x128xf32>
    %9 = arith.mulf %5, %5 : vector<1x128xf32>
    %10 = arith.subf %8, %9 : vector<1x128xf32>
    %cst_5 = arith.constant 9.99999974E-6 : f32
    %11 = vector.broadcast %cst_5 : f32 to vector<1x128xf32>
    %12 = arith.addf %10, %11 : vector<1x128xf32>
    %13 = math.rsqrt %12 : vector<1x128xf32>
    %c0_6 = arith.constant 0 : index
    %c0_7 = arith.constant 0 : index
    %14 = vector.load %arg5[%c0_6, %c0_7] : memref<1x128xf32, #tpu.memory_space<vmem>>, vector<1x128xf32>
    %15 = arith.mulf %13, %14 : vector<1x128xf32>
    %16 = vector.broadcast %5 : vector<1x128xf32> to vector<16x128xf32>
    %17 = arith.subf %1, %16 : vector<16x128xf32>
    %18 = vector.broadcast %15 : vector<1x128xf32> to vector<16x128xf32>
    %19 = arith.mulf %17, %18 : vector<16x128xf32>
    %c0_8 = arith.constant 0 : index
    %c0_9 = arith.constant 0 : index
    %20 = vector.load %arg6[%c0_8, %c0_9] : memref<1x128xf32, #tpu.memory_space<vmem>>, vector<1x128xf32>
    %21 = vector.broadcast %20 : vector<1x128xf32> to vector<16x128xf32>
    %22 = arith.addf %19, %21 : vector<16x128xf32>
    %cst_10 = arith.constant 0.000000e+00 : f32
    %23 = vector.broadcast %cst_10 : f32 to vector<16x128xf32>
    %24 = arith.maximumf %22, %23 : vector<16x128xf32>
    %cst_11 = arith.constant 0.000000e+00 : f32
    %25 = vector.broadcast %cst_11 : f32 to vector<1x128xf32>
    %26 = tpu.concatenate %25, %24, %25 in 0 : vector<1x128xf32>, vector<16x128xf32>, vector<1x128xf32> -> vector<18x128xf32>
    %cst_12 = arith.constant 0.000000e+00 : f32
    %27 = vector.broadcast %cst_12 : f32 to vector<16x128xf32>
    %28 = vector.extract_strided_slice %26 {offsets = [0, 0], sizes = [16, 128], strides = [1, 1]} : vector<18x128xf32> to vector<16x128xf32>
    %29 = arith.truncf %28 : vector<16x128xf32> to vector<16x128xbf16>
    %c0_13 = arith.constant 0 : index
    %c0_14 = arith.constant 0 : index
    %c0_15 = arith.constant 0 : index
    %30 = vector.load %arg3[%c0_13, %c0_14, %c0_15] : memref<3x128x128xbf16, #tpu.memory_space<vmem>>, vector<1x128x128xbf16>
    %31 = vector.shape_cast %30 : vector<1x128x128xbf16> to vector<128x128xbf16>
    %cst_16 = arith.constant dense<0.000000e+00> : vector<16x128xf32>
    %32 = tpu.matmul %29, %31, %cst_16 {dimension_numbers = #tpu.dot_dimension_numbers<[1], [0], [0], [1], [0, 0, 1, 1], [], []>} : vector<16x128xbf16>, vector<128x128xbf16>, vector<16x128xf32> -> vector<16x128xf32>
    %33 = arith.addf %27, %32 : vector<16x128xf32>
    %34 = vector.extract_strided_slice %26 {offsets = [1, 0], sizes = [16, 128], strides = [1, 1]} : vector<18x128xf32> to vector<16x128xf32>
    %35 = arith.truncf %34 : vector<16x128xf32> to vector<16x128xbf16>
    %c1 = arith.constant 1 : index
    %c0_17 = arith.constant 0 : index
    %c0_18 = arith.constant 0 : index
    %36 = vector.load %arg3[%c1, %c0_17, %c0_18] : memref<3x128x128xbf16, #tpu.memory_space<vmem>>, vector<1x128x128xbf16>
    %37 = vector.shape_cast %36 : vector<1x128x128xbf16> to vector<128x128xbf16>
    %cst_19 = arith.constant dense<0.000000e+00> : vector<16x128xf32>
    %38 = tpu.matmul %35, %37, %cst_19 {dimension_numbers = #tpu.dot_dimension_numbers<[1], [0], [0], [1], [0, 0, 1, 1], [], []>} : vector<16x128xbf16>, vector<128x128xbf16>, vector<16x128xf32> -> vector<16x128xf32>
    %39 = arith.addf %33, %38 : vector<16x128xf32>
    %40 = vector.extract_strided_slice %26 {offsets = [2, 0], sizes = [16, 128], strides = [1, 1]} : vector<18x128xf32> to vector<16x128xf32>
    %41 = arith.truncf %40 : vector<16x128xf32> to vector<16x128xbf16>
    %c2 = arith.constant 2 : index
    %c0_20 = arith.constant 0 : index
    %c0_21 = arith.constant 0 : index
    %42 = vector.load %arg3[%c2, %c0_20, %c0_21] : memref<3x128x128xbf16, #tpu.memory_space<vmem>>, vector<1x128x128xbf16>
    %43 = vector.shape_cast %42 : vector<1x128x128xbf16> to vector<128x128xbf16>
    %cst_22 = arith.constant dense<0.000000e+00> : vector<16x128xf32>
    %44 = tpu.matmul %41, %43, %cst_22 {dimension_numbers = #tpu.dot_dimension_numbers<[1], [0], [0], [1], [0, 0, 1, 1], [], []>} : vector<16x128xbf16>, vector<128x128xbf16>, vector<16x128xf32> -> vector<16x128xf32>
    %45 = arith.addf %39, %44 : vector<16x128xf32>
    %c0_23 = arith.constant 0 : index
    %c0_24 = arith.constant 0 : index
    %46 = vector.load %arg4[%c0_23, %c0_24] : memref<1x128xf32, #tpu.memory_space<vmem>>, vector<1x128xf32>
    %47 = vector.broadcast %46 : vector<1x128xf32> to vector<16x128xf32>
    %48 = arith.addf %45, %47 : vector<16x128xf32>
    %c0_25 = arith.constant 0 : index
    %c0_26 = arith.constant 0 : index
    %c0_27 = arith.constant 0 : index
    %49 = vector.load %arg7[%c0_25, %c0_26, %c0_27] : memref<1x16x128xf32, #tpu.memory_space<vmem>>, vector<1x16x128xf32>
    %50 = vector.shape_cast %49 : vector<1x16x128xf32> to vector<16x128xf32>
    %51 = vector.shape_cast %48 : vector<16x128xf32> to vector<1x16x128xf32>
    tpu.vector_store %arg7[%c0_25, %c0_26, %c0_27], %51 {strides = array<i32>} : memref<1x16x128xf32, #tpu.memory_space<vmem>>, vector<1x16x128xf32>,
    %cst_28 = arith.constant dense<0.000000e+00> : vector<128xf32>
    %52 = vector.multi_reduction <add>, %48, %cst_28 [0] : vector<16x128xf32> to vector<128xf32>
    %53 = vector.shape_cast %52 : vector<128xf32> to vector<1x128xf32>
    %54 = arith.mulf %48, %48 : vector<16x128xf32>
    %cst_29 = arith.constant dense<0.000000e+00> : vector<128xf32>
    %55 = vector.multi_reduction <add>, %54, %cst_29 [0] : vector<16x128xf32> to vector<128xf32>
    %56 = vector.shape_cast %55 : vector<128xf32> to vector<1x128xf32>
    %57 = tpu.concatenate %53, %56 in 0 : vector<1x128xf32>, vector<1x128xf32> -> vector<2x128xf32>
    %c0_30 = arith.constant 0 : index
    %c0_31 = arith.constant 0 : index
    %c0_32 = arith.constant 0 : index
    %58 = vector.load %arg8[%c0_30, %c0_31, %c0_32] : memref<1x2x128xf32, #tpu.memory_space<vmem>>, vector<1x2x128xf32>
    %59 = vector.shape_cast %58 : vector<1x2x128xf32> to vector<2x128xf32>
    %60 = vector.shape_cast %57 : vector<2x128xf32> to vector<1x2x128xf32>
    tpu.vector_store %arg8[%c0_30, %c0_31, %c0_32], %60 {strides = array<i32>} : memref<1x2x128xf32, #tpu.memory_space<vmem>>, vector<1x2x128xf32>,
    return
  }
  func.func @transform_0(%arg0: i32) -> (i32, i32, i32) {
    %c0_i32 = arith.constant 0 : i32
    %c0_i32_0 = arith.constant 0 : i32
    %c0_i32_1 = arith.constant 0 : i32
    return %arg0, %c0_i32, %c0_i32_0 : i32, i32, i32
  }
  func.func @transform_1(%arg0: i32) -> (i32, i32) {
    %c0_i32 = arith.constant 0 : i32
    %c0_i32_0 = arith.constant 0 : i32
    %c0_i32_1 = arith.constant 0 : i32
    return %c0_i32, %c0_i32_0 : i32, i32
  }
  func.func @transform_2(%arg0: i32) -> (i32, i32, i32) {
    %c0_i32 = arith.constant 0 : i32
    %c0_i32_0 = arith.constant 0 : i32
    %c0_i32_1 = arith.constant 0 : i32
    %c0_i32_2 = arith.constant 0 : i32
    return %c0_i32, %c0_i32_0, %c0_i32_1 : i32, i32, i32
  }
  func.func @transform_3(%arg0: i32) -> (i32, i32) {
    %c0_i32 = arith.constant 0 : i32
    %c0_i32_0 = arith.constant 0 : i32
    %c0_i32_1 = arith.constant 0 : i32
    return %c0_i32, %c0_i32_0 : i32, i32
  }
  func.func @transform_4(%arg0: i32) -> (i32, i32) {
    %c0_i32 = arith.constant 0 : i32
    %c0_i32_0 = arith.constant 0 : i32
    %c0_i32_1 = arith.constant 0 : i32
    return %c0_i32, %c0_i32_0 : i32, i32
  }
  func.func @transform_5(%arg0: i32) -> (i32, i32) {
    %c0_i32 = arith.constant 0 : i32
    %c0_i32_0 = arith.constant 0 : i32
    %c0_i32_1 = arith.constant 0 : i32
    return %c0_i32, %c0_i32_0 : i32, i32
  }
  func.func @transform_6(%arg0: i32) -> (i32, i32, i32) {
    %c0_i32 = arith.constant 0 : i32
    %c0_i32_0 = arith.constant 0 : i32
    %c0_i32_1 = arith.constant 0 : i32
    return %arg0, %c0_i32, %c0_i32_0 : i32, i32, i32
  }
  func.func @transform_7(%arg0: i32) -> (i32, i32, i32) {
    %c0_i32 = arith.constant 0 : i32
    %c0_i32_0 = arith.constant 0 : i32
    %c0_i32_1 = arith.constant 0 : i32
    return %arg0, %c0_i32, %c0_i32_0 : i32, i32, i32
  }
}

</mosaic_0001>

<llo_original>
// kernel: conv_block_pallas.3
$region0: #{conv_block_pallas.3}
  #allocation0 [shape = 'u32[]', space=smem, size = 0x4, offset = 0x4, fixed_abs, tag = 'smem constant byte address 0x4 - core index']
  #allocation1 [shape = 'u32[72,128]{1,0:T(1,128)}', space=vmem, size = 0x9000, scoped, tag = 'internal scratch']
  %s0 = inlined_call_operand.vmem [shape: bf16[2,16,12], index: 0, kind: input, shape index: {}]
  %s1 = inlined_call_operand.vmem [shape: bf16[12,128], index: 1, kind: input, shape index: {}]
  %s2 = inlined_call_operand.vmem [shape: f32[1,128], index: 2, kind: input, shape index: {}]
  %s3 = inlined_call_operand.vmem [shape: f32[2,16,128], index: 3, kind: output, shape index: {0}]
  %s4 = inlined_call_operand.vmem [shape: f32[2,2,128], index: 4, kind: output, shape index: {1}]
  %5 = xla_tuple %s3, %s4
  %s6 = sld [smem:[#allocation0]]
  $region53: #{conv_block_pallas.3} parent=0
    _
  %s8 = ssub.s32 1, %s6
  %s9 = scalar_select 0, %s8, %s6
  loop: start=0, step=1, limit=4
  $region2: #{conv_block_pallas.3} parent=0 // loop_pre_header
    _
  $region3: #{conv_block_pallas.3} parent=0 // loop_header
    %s11 = sphi 0, %s15
    %p12 = scmp.ge.s32.totalorder %s11, 4
    %s21 = sphi 0, %s23
    %s24 = sphi 0, %s21
    %s25 = sphi 0, %s24
    %s41 = sphi 0, %s25
    %s45 = sphi 0, %s45
    %s47 = sphi 0, %s45
    %s48 = sphi 0, %s47
    %s62 = sphi 0, %s48
    %s66 = sphi 0, %s66
    %s68 = sphi 0, %s66
    %s69 = sphi 0, %s68
    %s83 = sphi 0, %s69
    %s89 = sphi 0, %s91
    %s92 = sphi 0, %s89
    %s93 = sphi 0, %s92
    %s109 = sphi 0, %s93
    %s115 = sphi 0, %s117
    %s118 = sphi 0, %s115
    %s119 = sphi 0, %s118
    %s135 = sphi 0, %s119
  $region4: #{conv_block_pallas.3} parent=0 // loop_header_branch
    %14 = sbr.rel (%p12) target = $region8
  $region5: #{conv_block_pallas.3} parent=0 // loop_body
    %s16 = ssub.s32 %s11, 1
    %s17 = ssub.s32 %s11, 2
    %s18 = sadd.s32 %s11, 1
    %s19 = ssub.s32 %s11, %s18
    %p20 = scmp.eq.s32.totalorder %s19, 0
    %s22 = sadd.s32 %s21, 1
    %s23 = scalar_select %p20, %s21, %s22
    %p26 = pneg %p20
    %p27 = scmp.eq.s32.totalorder %s11, 1
    %p28 = por %p26, %p27
    %p29 = scmp.ne.s32.totalorder %s21, %s24
    %p30 = scmp.eq.s32.totalorder %s11, 0
    %p31 = por %p29, %p30
    %p32 = scmp.ne.s32.totalorder %s21, %s24
    %p33 = scmp.eq.s32.totalorder %s16, 1
    %p34 = por %p32, %p33
    %p35 = scmp.ne.s32.totalorder %s24, %s25
    %p36 = scmp.eq.s32.totalorder %s16, 0
    %p37 = por %p35, %p36
    %p38 = scmp.ne.s32.totalorder %s24, %s25
    %p39 = scmp.eq.s32.totalorder %s17, 1
    %p40 = por %p38, %p39
    %p42 = scmp.ne.s32.totalorder %s25, %s41
    %p43 = scmp.eq.s32.totalorder %s17, 0
    %p44 = por %p42, %p43
    %s46 = sadd.s32 %s45, 1
    %p49 = scmp.eq.s32.totalorder %s11, 1
    %p50 = scmp.ne.s32.totalorder %s45, %s47
    %p51 = scmp.eq.s32.totalorder %s11, 0
    %p52 = por %p50, %p51
    %p53 = scmp.ne.s32.totalorder %s45, %s47
    %p54 = scmp.eq.s32.totalorder %s16, 1
    %p55 = por %p53, %p54
    %p56 = scmp.ne.s32.totalorder %s47, %s48
    %p57 = scmp.eq.s32.totalorder %s16, 0
    %p58 = por %p56, %p57
    %p59 = scmp.ne.s32.totalorder %s47, %s48
    %p60 = scmp.eq.s32.totalorder %s17, 1
    %p61 = por %p59, %p60
    %p63 = scmp.ne.s32.totalorder %s48, %s62
    %p64 = scmp.eq.s32.totalorder %s17, 0
    %p65 = por %p63, %p64
    %s67 = sadd.s32 %s66, 1
    %p70 = scmp.eq.s32.totalorder %s11, 1
    %p71 = scmp.ne.s32.totalorder %s66, %s68
    %p72 = scmp.eq.s32.totalorder %s11, 0
    %p73 = por %p71, %p72
    %p74 = scmp.ne.s32.totalorder %s66, %s68
    %p75 = scmp.eq.s32.totalorder %s16, 1
    %p76 = por %p74, %p75
    %p77 = scmp.ne.s32.totalorder %s68, %s69
    %p78 = scmp.eq.s32.totalorder %s16, 0
    %p79 = por %p77, %p78
    %p80 = scmp.ne.s32.totalorder %s68, %s69
    %p81 = scmp.eq.s32.totalorder %s17, 1
    %p82 = por %p80, %p81
    %p84 = scmp.ne.s32.totalorder %s69, %s83
    %p85 = scmp.eq.s32.totalorder %s17, 0
    %p86 = por %p84, %p85
    %s87 = ssub.s32 %s11, %s18
    %p88 = scmp.eq.s32.totalorder %s87, 0
    %s90 = sadd.s32 %s89, 1
    %s91 = scalar_select %p88, %s89, %s90
    %p94 = pneg %p88
    %p95 = scmp.eq.s32.totalorder %s11, 1
    %p96 = por %p94, %p95
    %p97 = scmp.ne.s32.totalorder %s89, %s92
    %p98 = scmp.eq.s32.totalorder %s11, 0
    %p99 = por %p97, %p98
    %p100 = scmp.ne.s32.totalorder %s89, %s92
    %p101 = scmp.eq.s32.totalorder %s16, 1
    %p102 = por %p100, %p101
    %p103 = scmp.ne.s32.totalorder %s92, %s93
    %p104 = scmp.eq.s32.totalorder %s16, 0
    %p105 = por %p103, %p104
    %p106 = scmp.ne.s32.totalorder %s92, %s93
    %p107 = scmp.eq.s32.totalorder %s17, 1
    %p108 = por %p106, %p107
    %p110 = scmp.ne.s32.totalorder %s93, %s109
    %p111 = scmp.eq.s32.totalorder %s17, 0
    %p112 = por %p110, %p111
    %s113 = ssub.s32 %s11, %s18
    %p114 = scmp.eq.s32.totalorder %s113, 0
    %s116 = sadd.s32 %s115, 1
    %s117 = scalar_select %p114, %s115, %s116
    %p120 = pneg %p114
    %p121 = scmp.eq.s32.totalorder %s11, 1
    %p122 = por %p120, %p121
    %p123 = scmp.ne.s32.totalorder %s115, %s118
    %p124 = scmp.eq.s32.totalorder %s11, 0
    %p125 = por %p123, %p124
    %p126 = scmp.ne.s32.totalorder %s115, %s118
    %p127 = scmp.eq.s32.totalorder %s16, 1
    %p128 = por %p126, %p127
    %p129 = scmp.ne.s32.totalorder %s118, %s119
    %p130 = scmp.eq.s32.totalorder %s16, 0
    %p131 = por %p129, %p130
    %p132 = scmp.ne.s32.totalorder %s118, %s119
    %p133 = scmp.eq.s32.totalorder %s17, 1
    %p134 = por %p132, %p133
    %p136 = scmp.ne.s32.totalorder %s119, %s135
    %p137 = scmp.eq.s32.totalorder %s17, 0
    %p138 = por %p136, %p137
    %p139 = scmp.le.s32.totalorder 1, %s11
    %p140 = scmp.lt.s32.totalorder %s11, 3
    %p141 = pnand %p139, %p140
    %p142 = pneg %p141
    // Predicated region
    $region9: #{conv_block_pallas.3} parent=5 // pred_check
      _
    $region10: #{conv_block_pallas.3} parent=5 // pred_check_branch
      %144 = sbr.rel (%p141) target = $region12
    $region11: #{conv_block_pallas.3} parent=5 // pred_region
      %s145 = ssub.s32 %s11, 1
      // Predicated region
      $region13: #{conv_block_pallas.3} parent=11 // pred_check
        %p146 = pneg %p58
      $region14: #{conv_block_pallas.3} parent=11 // pred_check_branch
        %148 = sbr.rel (%p146) target = $region16
      $region15: #{conv_block_pallas.3} parent=11 // pred_region
        _
      $region16: #{conv_block_pallas.3} parent=11 // pred_fallthru
        _
      // Predicated region
      $region17: #{conv_block_pallas.3} parent=11 // pred_check
        %p149 = pneg %p79
      $region18: #{conv_block_pallas.3} parent=11 // pred_check_branch
        %151 = sbr.rel (%p149) target = $region20
      $region19: #{conv_block_pallas.3} parent=11 // pred_region
        _
      $region20: #{conv_block_pallas.3} parent=11 // pred_fallthru
        _
    $region12: #{conv_block_pallas.3} parent=5 // pred_fallthru
      _
    %p152 = scmp.lt.s32.totalorder %s11, 2
    // Predicated region
    $region21: #{conv_block_pallas.3} parent=5 // pred_check
      %p153 = pneg %p152
    $region22: #{conv_block_pallas.3} parent=5 // pred_check_branch
      %155 = sbr.rel (%p153) target = $region24
    $region23: #{conv_block_pallas.3} parent=5 // pred_region
      // Predicated region
      $region25: #{conv_block_pallas.3} parent=23 // pred_check
        %p156 = pneg %p31
      $region26: #{conv_block_pallas.3} parent=23 // pred_check_branch
        %158 = sbr.rel (%p156) target = $region28
      $region27: #{conv_block_pallas.3} parent=23 // pred_region
        %p159 = scmp.lt.s32.totalorder %s11, 1
        %s160 = scalar_select %p159, %s11, 1
        %s161 = smul.addr %s160, 2
        %s162 = smul.addr %s161, 4
        %s163 = scalar_lea.vmem %s0, %s162
      $region28: #{conv_block_pallas.3} parent=23 // pred_fallthru
        _
    $region24: #{conv_block_pallas.3} parent=5 // pred_fallthru
      _
    %p164 = scmp.le.s32.totalorder 1, %s11
    %p165 = scmp.lt.s32.totalorder %s11, 3
    %p166 = pnand %p164, %p165
    %p167 = pneg %p166
    // Predicated region
    $region29: #{conv_block_pallas.3} parent=5 // pred_check
      _
    $region30: #{conv_block_pallas.3} parent=5 // pred_check_branch
      %169 = sbr.rel (%p166) target = $region32
    $region31: #{conv_block_pallas.3} parent=5 // pred_region
      %s170 = ssub.s32 %s11, 1
      %p171 = scmp.lt.s32.totalorder %s16, 1
      %s172 = scalar_select %p171, %s16, 1
      %s173 = smul.addr %s172, 2
      %s174 = smul.addr %s173, 4
      %s175 = scalar_lea.vmem %s0, %s174
      %p176 = pneg %p37
      %p177 = pneg %p34
      %p178 = pneg %p58
      %p179 = pneg %p55
      %p180 = pneg %p79
      %p181 = pneg %p76
      %p182 = pneg %p105
      %p183 = pneg %p102
      %p184 = scmp.lt.s32.totalorder %s16, 1
      %s185 = scalar_select %p184, %s16, 1
      %s186 = smul.addr %s185, 2
      %s187 = smul.addr %s186, 8
      %s188 = scalar_lea.vmem %s3, %s187
      %p189 = pneg %p131
      %p190 = pneg %p128
      %p191 = scmp.lt.s32.totalorder %s16, 1
      %s192 = scalar_select %p191, %s16, 1
      %s193 = smul.addr %s192, 2
      %s194 = scalar_lea.vmem %s4, %s193
      %p195 = scmp.lt.s32.totalorder %s16, 1
      %s196 = scalar_select %p195, %s16, 1
      %s197 = smul.addr %s196, 2
      %s198 = smul.addr %s197, 4
      %s199 = scalar_lea.vmem %s0, %s198
      %p200 = scmp.lt.s32.totalorder %s16, 1
      %s201 = scalar_select %p200, %s16, 1
      %s202 = smul.addr %s201, 2
      %s203 = smul.addr %s202, 8
      %s204 = scalar_lea.vmem %s3, %s203
      %p205 = scmp.lt.s32.totalorder %s16, 1
      %s206 = scalar_select %p205, %s16, 1
      %s207 = smul.addr %s206, 2
      %s208 = scalar_lea.vmem %s4, %s207
      %v210 = vld [vmem:[%s199] sm:$0xf]
      %v211 = vld [vmem:[%s199 + $0x4] sm:$0xf]
      %v212 = vld [vmem:[%s1] sm:$0xf]
      %v213 = vld [vmem:[%s1 + $0x4] sm:$0x3]
      %v214 = vld [vmem:[%s2] sm:$0x1]
      %v216 = vperm.slane %v214, 0
      %v220 = vunpack.c.l.b16 %v210
      %v221 = vunpack.c.l.b16 %v211
      %v222 = vpack.c.b16 %v221, %v220
      %v225 = vunpack.c.l.b16 %v212
      %v226 = vunpack.c.l.b16 %v213
      %v227 = vpack.c.b16 %v226, %v225
      %vm228 = vcmask 97280
      %v230 = vsel %vm228, %v222, 0
      %vm232 = vcmask 1045504
      %v234 = vsel %vm232, %v227, 0
      %236 = vmatpush.bf16.msra.mxu0 0
      %237 = vmatpush.bf16.msra.mxu0 0
      %238 = vmatpush.bf16.msra.mxu0 0
      %239 = vmatpush.bf16.msra.mxu0 0
      %240 = vmatpush.bf16.msra.mxu0 0
      %241 = vmatpush.bf16.msra.mxu0 0
      %242 = vmatpush.bf16.msra.mxu0 0
      %243 = vmatpush.bf16.msra.mxu0 %v234
      %244 = vmatmul.bf16.gmra.mxu0 %v230
      %v245 = vpop.f32.mrf.mxu0
      %v246 = vadd.f32 %v216, %v245
      %v247 = vpop.f32.mrf.mxu0
      %v248 = vadd.f32 %v216, %v247
      %249 = vdwg.mxu0
      %250 = vst [vmem:[%s204] sm:$0xff] %v246
      %251 = vst [vmem:[%s204 + $0x8] sm:$0xff] %v248
      %v252 = vadd.f32 %v246, %v248
      %v253 = vrot.slane %v252, 4
      %v254 = vadd.f32 %v252, %v253
      %v255 = vrot.slane %v254, 2
      %v256 = vadd.f32 %v254, %v255
      %v257 = vrot.slane %v256, 1
      %v258 = vadd.f32 %v256, %v257
      %v259 = vmul.f32 %v246, %v246
      %v260 = vmul.f32 %v248, %v248
      %v261 = vadd.f32 %v259, %v260
      %v262 = vrot.slane %v261, 4
      %v263 = vadd.f32 %v261, %v262
      %v264 = vrot.slane %v263, 2
      %v265 = vadd.f32 %v263, %v264
      %v266 = vrot.slane %v265, 1
      %v267 = vadd.f32 %v265, %v266
      %vm268 = vcmask 1040384
      %v269 = vsel %vm268, %v258, %v267
      %270 = vst [vmem:[%s208] sm:$0x3] %v269
      %p271 = scmp.lt.s32.totalorder %s16, 1
      %s272 = scalar_select %p271, %s16, 1
      %s273 = smul.addr %s272, 2
      %s274 = smul.addr %s273, 8
      %s275 = scalar_lea.vmem %s3, %s274
      %p276 = scmp.lt.s32.totalorder %s16, 1
      %s277 = scalar_select %p276, %s16, 1
      %s278 = smul.addr %s277, 2
      %s279 = scalar_lea.vmem %s4, %s278
      // Predicated region
      $region33: #{conv_block_pallas.3} parent=31 // pred_check
        %p280 = pneg %p102
      $region34: #{conv_block_pallas.3} parent=31 // pred_check_branch
        %282 = sbr.rel (%p280) target = $region36
      $region35: #{conv_block_pallas.3} parent=31 // pred_region
        _
      $region36: #{conv_block_pallas.3} parent=31 // pred_fallthru
        _
      // Predicated region
      $region37: #{conv_block_pallas.3} parent=31 // pred_check
        %p283 = pneg %p128
      $region38: #{conv_block_pallas.3} parent=31 // pred_check_branch
        %285 = sbr.rel (%p283) target = $region40
      $region39: #{conv_block_pallas.3} parent=31 // pred_region
        _
      $region40: #{conv_block_pallas.3} parent=31 // pred_fallthru
        _
    $region32: #{conv_block_pallas.3} parent=5 // pred_fallthru
      _
    %p286 = scmp.le.s32.totalorder 2, %s11
    // Predicated region
    $region41: #{conv_block_pallas.3} parent=5 // pred_check
      %p287 = pneg %p286
    $region42: #{conv_block_pallas.3} parent=5 // pred_check_branch
      %289 = sbr.rel (%p287) target = $region44
    $region43: #{conv_block_pallas.3} parent=5 // pred_region
      %s290 = ssub.s32 %s11, 2
      // Predicated region
      $region45: #{conv_block_pallas.3} parent=43 // pred_check
        %p291 = pneg %p108
      $region46: #{conv_block_pallas.3} parent=43 // pred_check_branch
        %293 = sbr.rel (%p291) target = $region48
      $region47: #{conv_block_pallas.3} parent=43 // pred_region
        %p294 = scmp.lt.s32.totalorder %s17, 1
        %s295 = scalar_select %p294, %s17, 1
        %s296 = smul.addr %s295, 2
        %s297 = smul.addr %s296, 8
        %s298 = scalar_lea.vmem %s3, %s297
      $region48: #{conv_block_pallas.3} parent=43 // pred_fallthru
        _
      // Predicated region
      $region49: #{conv_block_pallas.3} parent=43 // pred_check
        %p299 = pneg %p134
      $region50: #{conv_block_pallas.3} parent=43 // pred_check_branch
        %301 = sbr.rel (%p299) target = $region52
      $region51: #{conv_block_pallas.3} parent=43 // pred_region
        %p302 = scmp.lt.s32.totalorder %s17, 1
        %s303 = scalar_select %p302, %s17, 1
        %s304 = smul.addr %s303, 2
        %s305 = scalar_lea.vmem %s4, %s304
      $region52: #{conv_block_pallas.3} parent=43 // pred_fallthru
        _
    $region44: #{conv_block_pallas.3} parent=5 // pred_fallthru
      _
  $region6: #{conv_block_pallas.3} parent=0 // loop_footer
    %s15 = sadd.s32 1, %s11
  $region7: #{conv_block_pallas.3} parent=0 // loop_footer_branch
    %10 = sbr.rel target = $region3
  $region8: #{conv_block_pallas.3} parent=0 // loop_exit
    _

// kernel: conv_block_pallas.5
$region0: #{conv_block_pallas.5}
  #allocation0 [shape = 'u32[]', space=smem, size = 0x4, offset = 0x4, fixed_abs, tag = 'smem constant byte address 0x4 - core index']
  #allocation1 [shape = 'u32[72,128]{1,0:T(1,128)}', space=vmem, size = 0x9000, scoped, tag = 'internal scratch']
  %s0 = inlined_call_operand.vmem [shape: f32[2,16,128], index: 0, kind: input, shape index: {}]
  %s1 = inlined_call_operand.vmem [shape: f32[2,128], index: 1, kind: input, shape index: {}]
  %s2 = inlined_call_operand.vmem [shape: f32[1,128], index: 2, kind: input, shape index: {}]
  %s3 = inlined_call_operand.vmem [shape: f32[1,128], index: 3, kind: input, shape index: {}]
  %s4 = inlined_call_operand.vmem [shape: f32[2,16,128], index: 4, kind: output, shape index: {}]
  %s5 = sld [smem:[#allocation0]]
  $region49: #{conv_block_pallas.5} parent=0
    _
  %s7 = ssub.s32 1, %s5
  %s8 = scalar_select 0, %s7, %s5
  loop: start=0, step=1, limit=4
  $region2: #{conv_block_pallas.5} parent=0 // loop_pre_header
    _
  $region3: #{conv_block_pallas.5} parent=0 // loop_header
    %s10 = sphi 0, %s14
    %p11 = scmp.ge.s32.totalorder %s10, 4
    %s20 = sphi 0, %s22
    %s23 = sphi 0, %s20
    %s24 = sphi 0, %s23
    %s40 = sphi 0, %s24
    %s44 = sphi 0, %s44
    %s46 = sphi 0, %s44
    %s47 = sphi 0, %s46
    %s61 = sphi 0, %s47
    %s65 = sphi 0, %s65
    %s67 = sphi 0, %s65
    %s68 = sphi 0, %s67
    %s82 = sphi 0, %s68
    %s86 = sphi 0, %s86
    %s88 = sphi 0, %s86
    %s89 = sphi 0, %s88
    %s103 = sphi 0, %s89
    %s109 = sphi 0, %s111
    %s112 = sphi 0, %s109
    %s113 = sphi 0, %s112
    %s129 = sphi 0, %s113
  $region4: #{conv_block_pallas.5} parent=0 // loop_header_branch
    %13 = sbr.rel (%p11) target = $region8
  $region5: #{conv_block_pallas.5} parent=0 // loop_body
    %s15 = ssub.s32 %s10, 1
    %s16 = ssub.s32 %s10, 2
    %s17 = sadd.s32 %s10, 1
    %s18 = ssub.s32 %s10, %s17
    %p19 = scmp.eq.s32.totalorder %s18, 0
    %s21 = sadd.s32 %s20, 1
    %s22 = scalar_select %p19, %s20, %s21
    %p25 = pneg %p19
    %p26 = scmp.eq.s32.totalorder %s10, 1
    %p27 = por %p25, %p26
    %p28 = scmp.ne.s32.totalorder %s20, %s23
    %p29 = scmp.eq.s32.totalorder %s10, 0
    %p30 = por %p28, %p29
    %p31 = scmp.ne.s32.totalorder %s20, %s23
    %p32 = scmp.eq.s32.totalorder %s15, 1
    %p33 = por %p31, %p32
    %p34 = scmp.ne.s32.totalorder %s23, %s24
    %p35 = scmp.eq.s32.totalorder %s15, 0
    %p36 = por %p34, %p35
    %p37 = scmp.ne.s32.totalorder %s23, %s24
    %p38 = scmp.eq.s32.totalorder %s16, 1
    %p39 = por %p37, %p38
    %p41 = scmp.ne.s32.totalorder %s24, %s40
    %p42 = scmp.eq.s32.totalorder %s16, 0
    %p43 = por %p41, %p42
    %s45 = sadd.s32 %s44, 1
    %p48 = scmp.eq.s32.totalorder %s10, 1
    %p49 = scmp.ne.s32.totalorder %s44, %s46
    %p50 = scmp.eq.s32.totalorder %s10, 0
    %p51 = por %p49, %p50
    %p52 = scmp.ne.s32.totalorder %s44, %s46
    %p53 = scmp.eq.s32.totalorder %s15, 1
    %p54 = por %p52, %p53
    %p55 = scmp.ne.s32.totalorder %s46, %s47
    %p56 = scmp.eq.s32.totalorder %s15, 0
    %p57 = por %p55, %p56
    %p58 = scmp.ne.s32.totalorder %s46, %s47
    %p59 = scmp.eq.s32.totalorder %s16, 1
    %p60 = por %p58, %p59
    %p62 = scmp.ne.s32.totalorder %s47, %s61
    %p63 = scmp.eq.s32.totalorder %s16, 0
    %p64 = por %p62, %p63
    %s66 = sadd.s32 %s65, 1
    %p69 = scmp.eq.s32.totalorder %s10, 1
    %p70 = scmp.ne.s32.totalorder %s65, %s67
    %p71 = scmp.eq.s32.totalorder %s10, 0
    %p72 = por %p70, %p71
    %p73 = scmp.ne.s32.totalorder %s65, %s67
    %p74 = scmp.eq.s32.totalorder %s15, 1
    %p75 = por %p73, %p74
    %p76 = scmp.ne.s32.totalorder %s67, %s68
    %p77 = scmp.eq.s32.totalorder %s15, 0
    %p78 = por %p76, %p77
    %p79 = scmp.ne.s32.totalorder %s67, %s68
    %p80 = scmp.eq.s32.totalorder %s16, 1
    %p81 = por %p79, %p80
    %p83 = scmp.ne.s32.totalorder %s68, %s82
    %p84 = scmp.eq.s32.totalorder %s16, 0
    %p85 = por %p83, %p84
    %s87 = sadd.s32 %s86, 1
    %p90 = scmp.eq.s32.totalorder %s10, 1
    %p91 = scmp.ne.s32.totalorder %s86, %s88
    %p92 = scmp.eq.s32.totalorder %s10, 0
    %p93 = por %p91, %p92
    %p94 = scmp.ne.s32.totalorder %s86, %s88
    %p95 = scmp.eq.s32.totalorder %s15, 1
    %p96 = por %p94, %p95
    %p97 = scmp.ne.s32.totalorder %s88, %s89
    %p98 = scmp.eq.s32.totalorder %s15, 0
    %p99 = por %p97, %p98
    %p100 = scmp.ne.s32.totalorder %s88, %s89
    %p101 = scmp.eq.s32.totalorder %s16, 1
    %p102 = por %p100, %p101
    %p104 = scmp.ne.s32.totalorder %s89, %s103
    %p105 = scmp.eq.s32.totalorder %s16, 0
    %p106 = por %p104, %p105
    %s107 = ssub.s32 %s10, %s17
    %p108 = scmp.eq.s32.totalorder %s107, 0
    %s110 = sadd.s32 %s109, 1
    %s111 = scalar_select %p108, %s109, %s110
    %p114 = pneg %p108
    %p115 = scmp.eq.s32.totalorder %s10, 1
    %p116 = por %p114, %p115
    %p117 = scmp.ne.s32.totalorder %s109, %s112
    %p118 = scmp.eq.s32.totalorder %s10, 0
    %p119 = por %p117, %p118
    %p120 = scmp.ne.s32.totalorder %s109, %s112
    %p121 = scmp.eq.s32.totalorder %s15, 1
    %p122 = por %p120, %p121
    %p123 = scmp.ne.s32.totalorder %s112, %s113
    %p124 = scmp.eq.s32.totalorder %s15, 0
    %p125 = por %p123, %p124
    %p126 = scmp.ne.s32.totalorder %s112, %s113
    %p127 = scmp.eq.s32.totalorder %s16, 1
    %p128 = por %p126, %p127
    %p130 = scmp.ne.s32.totalorder %s113, %s129
    %p131 = scmp.eq.s32.totalorder %s16, 0
    %p132 = por %p130, %p131
    %p133 = scmp.le.s32.totalorder 1, %s10
    %p134 = scmp.lt.s32.totalorder %s10, 3
    %p135 = pnand %p133, %p134
    %p136 = pneg %p135
    // Predicated region
    $region9: #{conv_block_pallas.5} parent=5 // pred_check
      _
    $region10: #{conv_block_pallas.5} parent=5 // pred_check_branch
      %138 = sbr.rel (%p135) target = $region12
    $region11: #{conv_block_pallas.5} parent=5 // pred_region
      %s139 = ssub.s32 %s10, 1
      // Predicated region
      $region13: #{conv_block_pallas.5} parent=11 // pred_check
        %p140 = pneg %p57
      $region14: #{conv_block_pallas.5} parent=11 // pred_check_branch
        %142 = sbr.rel (%p140) target = $region16
      $region15: #{conv_block_pallas.5} parent=11 // pred_region
        _
      $region16: #{conv_block_pallas.5} parent=11 // pred_fallthru
        _
      // Predicated region
      $region17: #{conv_block_pallas.5} parent=11 // pred_check
        %p143 = pneg %p78
      $region18: #{conv_block_pallas.5} parent=11 // pred_check_branch
        %145 = sbr.rel (%p143) target = $region20
      $region19: #{conv_block_pallas.5} parent=11 // pred_region
        _
      $region20: #{conv_block_pallas.5} parent=11 // pred_fallthru
        _
      // Predicated region
      $region21: #{conv_block_pallas.5} parent=11 // pred_check
        %p146 = pneg %p99
      $region22: #{conv_block_pallas.5} parent=11 // pred_check_branch
        %148 = sbr.rel (%p146) target = $region24
      $region23: #{conv_block_pallas.5} parent=11 // pred_region
        _
      $region24: #{conv_block_pallas.5} parent=11 // pred_fallthru
        _
    $region12: #{conv_block_pallas.5} parent=5 // pred_fallthru
      _
    %p149 = scmp.lt.s32.totalorder %s10, 2
    // Predicated region
    $region25: #{conv_block_pallas.5} parent=5 // pred_check
      %p150 = pneg %p149
    $region26: #{conv_block_pallas.5} parent=5 // pred_check_branch
      %152 = sbr.rel (%p150) target = $region28
    $region27: #{conv_block_pallas.5} parent=5 // pred_region
      // Predicated region
      $region29: #{conv_block_pallas.5} parent=27 // pred_check
        %p153 = pneg %p30
      $region30: #{conv_block_pallas.5} parent=27 // pred_check_branch
        %155 = sbr.rel (%p153) target = $region32
      $region31: #{conv_block_pallas.5} parent=27 // pred_region
        %p156 = scmp.lt.s32.totalorder %s10, 1
        %s157 = scalar_select %p156, %s10, 1
        %s158 = smul.addr %s157, 2
        %s159 = smul.addr %s158, 8
        %s160 = scalar_lea.vmem %s0, %s159
      $region32: #{conv_block_pallas.5} parent=27 // pred_fallthru
        _
    $region28: #{conv_block_pallas.5} parent=5 // pred_fallthru
      _
    %p161 = scmp.le.s32.totalorder 1, %s10
    %p162 = scmp.lt.s32.totalorder %s10, 3
    %p163 = pnand %p161, %p162
    %p164 = pneg %p163
    // Predicated region
    $region33: #{conv_block_pallas.5} parent=5 // pred_check
      _
    $region34: #{conv_block_pallas.5} parent=5 // pred_check_branch
      %166 = sbr.rel (%p163) target = $region36
    $region35: #{conv_block_pallas.5} parent=5 // pred_region
      %s167 = ssub.s32 %s10, 1
      %p168 = scmp.lt.s32.totalorder %s15, 1
      %s169 = scalar_select %p168, %s15, 1
      %s170 = smul.addr %s169, 2
      %s171 = smul.addr %s170, 8
      %s172 = scalar_lea.vmem %s0, %s171
      %p173 = pneg %p36
      %p174 = pneg %p33
      %p175 = pneg %p57
      %p176 = pneg %p54
      %p177 = pneg %p78
      %p178 = pneg %p75
      %p179 = pneg %p99
      %p180 = pneg %p96
      %p181 = pneg %p125
      %p182 = pneg %p122
      %p183 = scmp.lt.s32.totalorder %s15, 1
      %s184 = scalar_select %p183, %s15, 1
      %s185 = smul.addr %s184, 2
      %s186 = smul.addr %s185, 8
      %s187 = scalar_lea.vmem %s4, %s186
      %p188 = scmp.lt.s32.totalorder %s15, 1
      %s189 = scalar_select %p188, %s15, 1
      %s190 = smul.addr %s189, 2
      %s191 = smul.addr %s190, 8
      %s192 = scalar_lea.vmem %s0, %s191
      %p193 = scmp.lt.s32.totalorder %s15, 1
      %s194 = scalar_select %p193, %s15, 1
      %s195 = smul.addr %s194, 2
      %s196 = smul.addr %s195, 8
      %s197 = scalar_lea.vmem %s4, %s196
      %v198 = vld [vmem:[%s192] sm:$0xff]
      %v199 = vld [vmem:[%s192 + $0x8] sm:$0xff]
      %v200 = vld [vmem:[%s1] sm:$0x3]
      %v201 = vmul.f32 %v200, 0.03125
      %v202 = vmul.f32 %v201, %v201
      %v204 = vrot.slane %v202, 7
      %v206 = vsub.f32 %v201, %v204
      %v207 = vadd.f32 %v206, 1e-05
      %v208 = vrsqrt.pop %v207
      %v209 = vmul.f32 %v208, %v207
      %v210 = vmul.f32 %v209, %v208
      %v211 = vmul.f32 0.5, %v210
      %v212 = vsub.f32 1.5, %v211
      %v213 = vmul.f32 %v208, %v212
      %vm214 = vweird.f32 %v207
      %vm215 = vweird.f32 %v208
      %vm216 = vmor %vm214, %vm215
      %v217 = vsel %vm216, %v208, %v213
      %v218 = vld [vmem:[%s2] sm:$0x1]
      %v220 = vperm.slane %v218, 0
      %v222 = vmul.f32 %v217, %v220
      %v223 = vperm.slane %v201, 0
      %v224 = vsub.f32 %v198, %v223
      %v225 = vsub.f32 %v199, %v223
      %v226 = vperm.slane %v222, 1
      %v227 = vmul.f32 %v224, %v226
      %v228 = vmul.f32 %v225, %v226
      %v229 = vld [vmem:[%s3] sm:$0x1]
      %v231 = vperm.slane %v229, 0
      %v233 = vadd.f32 %v227, %v231
      %v234 = vadd.f32 %v228, %v231
      %v235 = vmax.f32 %v233, 0.0
      %v236 = vmax.f32 %v234, 0.0
      %237 = vst [vmem:[%s197] sm:$0xff] %v235
      %238 = vst [vmem:[%s197 + $0x8] sm:$0xff] %v236
      %p239 = scmp.lt.s32.totalorder %s15, 1
      %s240 = scalar_select %p239, %s15, 1
      %s241 = smul.addr %s240, 2
      %s242 = smul.addr %s241, 8
      %s243 = scalar_lea.vmem %s4, %s242
      // Predicated region
      $region37: #{conv_block_pallas.5} parent=35 // pred_check
        %p244 = pneg %p122
      $region38: #{conv_block_pallas.5} parent=35 // pred_check_branch
        %246 = sbr.rel (%p244) target = $region40
      $region39: #{conv_block_pallas.5} parent=35 // pred_region
        _
      $region40: #{conv_block_pallas.5} parent=35 // pred_fallthru
        _
    $region36: #{conv_block_pallas.5} parent=5 // pred_fallthru
      _
    %p247 = scmp.le.s32.totalorder 2, %s10
    // Predicated region
    $region41: #{conv_block_pallas.5} parent=5 // pred_check
      %p248 = pneg %p247
    $region42: #{conv_block_pallas.5} parent=5 // pred_check_branch
      %250 = sbr.rel (%p248) target = $region44
    $region43: #{conv_block_pallas.5} parent=5 // pred_region
      %s251 = ssub.s32 %s10, 2
      // Predicated region
      $region45: #{conv_block_pallas.5} parent=43 // pred_check
        %p252 = pneg %p128
      $region46: #{conv_block_pallas.5} parent=43 // pred_check_branch
        %254 = sbr.rel (%p252) target = $region48
      $region47: #{conv_block_pallas.5} parent=43 // pred_region
        %p255 = scmp.lt.s32.totalorder %s16, 1
        %s256 = scalar_select %p255, %s16, 1
        %s257 = smul.addr %s256, 2
        %s258 = smul.addr %s257, 8
        %s259 = scalar_lea.vmem %s4, %s258
      $region48: #{conv_block_pallas.5} parent=43 // pred_fallthru
        _
    $region44: #{conv_block_pallas.5} parent=5 // pred_fallthru
      _
  $region6: #{conv_block_pallas.5} parent=0 // loop_footer
    %s14 = sadd.s32 1, %s10
  $region7: #{conv_block_pallas.5} parent=0 // loop_footer_branch
    %9 = sbr.rel target = $region3
  $region8: #{conv_block_pallas.5} parent=0 // loop_exit
    _

// kernel: conv_block_pallas.4
$region0: #{conv_block_pallas.4}
  #allocation0 [shape = 'u32[]', space=smem, size = 0x4, offset = 0x4, fixed_abs, tag = 'smem constant byte address 0x4 - core index']
  #allocation1 [shape = 'u32[72,128]{1,0:T(1,128)}', space=vmem, size = 0x9000, scoped, tag = 'internal scratch']
  %s0 = inlined_call_operand.vmem [shape: f32[2,16,128], index: 0, kind: input, shape index: {}]
  %s1 = inlined_call_operand.vmem [shape: f32[2,128], index: 1, kind: input, shape index: {}]
  %s2 = inlined_call_operand.vmem [shape: bf16[3,128,128], index: 2, kind: input, shape index: {}]
  %s3 = inlined_call_operand.vmem [shape: f32[1,128], index: 3, kind: input, shape index: {}]
  %s4 = inlined_call_operand.vmem [shape: f32[1,128], index: 4, kind: input, shape index: {}]
  %s5 = inlined_call_operand.vmem [shape: f32[1,128], index: 5, kind: input, shape index: {}]
  %s6 = inlined_call_operand.vmem [shape: f32[2,16,128], index: 6, kind: output, shape index: {0}]
  %s7 = inlined_call_operand.vmem [shape: f32[2,2,128], index: 7, kind: output, shape index: {1}]
  %8 = xla_tuple %s6, %s7
  %s9 = sld [smem:[#allocation0]]
  $region65: #{conv_block_pallas.4} parent=0
    _
  %s11 = ssub.s32 1, %s9
  %s12 = scalar_select 0, %s11, %s9
  loop: start=0, step=1, limit=4
  $region2: #{conv_block_pallas.4} parent=0 // loop_pre_header
    _
  $region3: #{conv_block_pallas.4} parent=0 // loop_header
    %s14 = sphi 0, %s18
    %p15 = scmp.ge.s32.totalorder %s14, 4
    %s24 = sphi 0, %s26
    %s27 = sphi 0, %s24
    %s28 = sphi 0, %s27
    %s44 = sphi 0, %s28
    %s48 = sphi 0, %s48
    %s50 = sphi 0, %s48
    %s51 = sphi 0, %s50
    %s65 = sphi 0, %s51
    %s69 = sphi 0, %s69
    %s71 = sphi 0, %s69
    %s72 = sphi 0, %s71
    %s86 = sphi 0, %s72
    %s90 = sphi 0, %s90
    %s92 = sphi 0, %s90
    %s93 = sphi 0, %s92
    %s107 = sphi 0, %s93
    %s111 = sphi 0, %s111
    %s113 = sphi 0, %s111
    %s114 = sphi 0, %s113
    %s128 = sphi 0, %s114
    %s132 = sphi 0, %s132
    %s134 = sphi 0, %s132
    %s135 = sphi 0, %s134
    %s149 = sphi 0, %s135
    %s155 = sphi 0, %s157
    %s158 = sphi 0, %s155
    %s159 = sphi 0, %s158
    %s175 = sphi 0, %s159
    %s181 = sphi 0, %s183
    %s184 = sphi 0, %s181
    %s185 = sphi 0, %s184
    %s201 = sphi 0, %s185
  $region4: #{conv_block_pallas.4} parent=0 // loop_header_branch
    %17 = sbr.rel (%p15) target = $region8
  $region5: #{conv_block_pallas.4} parent=0 // loop_body
    %s19 = ssub.s32 %s14, 1
    %s20 = ssub.s32 %s14, 2
    %s21 = sadd.s32 %s14, 1
    %s22 = ssub.s32 %s14, %s21
    %p23 = scmp.eq.s32.totalorder %s22, 0
    %s25 = sadd.s32 %s24, 1
    %s26 = scalar_select %p23, %s24, %s25
    %p29 = pneg %p23
    %p30 = scmp.eq.s32.totalorder %s14, 1
    %p31 = por %p29, %p30
    %p32 = scmp.ne.s32.totalorder %s24, %s27
    %p33 = scmp.eq.s32.totalorder %s14, 0
    %p34 = por %p32, %p33
    %p35 = scmp.ne.s32.totalorder %s24, %s27
    %p36 = scmp.eq.s32.totalorder %s19, 1
    %p37 = por %p35, %p36
    %p38 = scmp.ne.s32.totalorder %s27, %s28
    %p39 = scmp.eq.s32.totalorder %s19, 0
    %p40 = por %p38, %p39
    %p41 = scmp.ne.s32.totalorder %s27, %s28
    %p42 = scmp.eq.s32.totalorder %s20, 1
    %p43 = por %p41, %p42
    %p45 = scmp.ne.s32.totalorder %s28, %s44
    %p46 = scmp.eq.s32.totalorder %s20, 0
    %p47 = por %p45, %p46
    %s49 = sadd.s32 %s48, 1
    %p52 = scmp.eq.s32.totalorder %s14, 1
    %p53 = scmp.ne.s32.totalorder %s48, %s50
    %p54 = scmp.eq.s32.totalorder %s14, 0
    %p55 = por %p53, %p54
    %p56 = scmp.ne.s32.totalorder %s48, %s50
    %p57 = scmp.eq.s32.totalorder %s19, 1
    %p58 = por %p56, %p57
    %p59 = scmp.ne.s32.totalorder %s50, %s51
    %p60 = scmp.eq.s32.totalorder %s19, 0
    %p61 = por %p59, %p60
    %p62 = scmp.ne.s32.totalorder %s50, %s51
    %p63 = scmp.eq.s32.totalorder %s20, 1
    %p64 = por %p62, %p63
    %p66 = scmp.ne.s32.totalorder %s51, %s65
    %p67 = scmp.eq.s32.totalorder %s20, 0
    %p68 = por %p66, %p67
    %s70 = sadd.s32 %s69, 1
    %p73 = scmp.eq.s32.totalorder %s14, 1
    %p74 = scmp.ne.s32.totalorder %s69, %s71
    %p75 = scmp.eq.s32.totalorder %s14, 0
    %p76 = por %p74, %p75
    %p77 = scmp.ne.s32.totalorder %s69, %s71
    %p78 = scmp.eq.s32.totalorder %s19, 1
    %p79 = por %p77, %p78
    %p80 = scmp.ne.s32.totalorder %s71, %s72
    %p81 = scmp.eq.s32.totalorder %s19, 0
    %p82 = por %p80, %p81
    %p83 = scmp.ne.s32.totalorder %s71, %s72
    %p84 = scmp.eq.s32.totalorder %s20, 1
    %p85 = por %p83, %p84
    %p87 = scmp.ne.s32.totalorder %s72, %s86
    %p88 = scmp.eq.s32.totalorder %s20, 0
    %p89 = por %p87, %p88
    %s91 = sadd.s32 %s90, 1
    %p94 = scmp.eq.s32.totalorder %s14, 1
    %p95 = scmp.ne.s32.totalorder %s90, %s92
    %p96 = scmp.eq.s32.totalorder %s14, 0
    %p97 = por %p95, %p96
    %p98 = scmp.ne.s32.totalorder %s90, %s92
    %p99 = scmp.eq.s32.totalorder %s19, 1
    %p100 = por %p98, %p99
    %p101 = scmp.ne.s32.totalorder %s92, %s93
    %p102 = scmp.eq.s32.totalorder %s19, 0
    %p103 = por %p101, %p102
    %p104 = scmp.ne.s32.totalorder %s92, %s93
    %p105 = scmp.eq.s32.totalorder %s20, 1
    %p106 = por %p104, %p105
    %p108 = scmp.ne.s32.totalorder %s93, %s107
    %p109 = scmp.eq.s32.totalorder %s20, 0
    %p110 = por %p108, %p109
    %s112 = sadd.s32 %s111, 1
    %p115 = scmp.eq.s32.totalorder %s14, 1
    %p116 = scmp.ne.s32.totalorder %s111, %s113
    %p117 = scmp.eq.s32.totalorder %s14, 0
    %p118 = por %p116, %p117
    %p119 = scmp.ne.s32.totalorder %s111, %s113
    %p120 = scmp.eq.s32.totalorder %s19, 1
    %p121 = por %p119, %p120
    %p122 = scmp.ne.s32.totalorder %s113, %s114
    %p123 = scmp.eq.s32.totalorder %s19, 0
    %p124 = por %p122, %p123
    %p125 = scmp.ne.s32.totalorder %s113, %s114
    %p126 = scmp.eq.s32.totalorder %s20, 1
    %p127 = por %p125, %p126
    %p129 = scmp.ne.s32.totalorder %s114, %s128
    %p130 = scmp.eq.s32.totalorder %s20, 0
    %p131 = por %p129, %p130
    %s133 = sadd.s32 %s132, 1
    %p136 = scmp.eq.s32.totalorder %s14, 1
    %p137 = scmp.ne.s32.totalorder %s132, %s134
    %p138 = scmp.eq.s32.totalorder %s14, 0
    %p139 = por %p137, %p138
    %p140 = scmp.ne.s32.totalorder %s132, %s134
    %p141 = scmp.eq.s32.totalorder %s19, 1
    %p142 = por %p140, %p141
    %p143 = scmp.ne.s32.totalorder %s134, %s135
    %p144 = scmp.eq.s32.totalorder %s19, 0
    %p145 = por %p143, %p144
    %p146 = scmp.ne.s32.totalorder %s134, %s135
    %p147 = scmp.eq.s32.totalorder %s20, 1
    %p148 = por %p146, %p147
    %p150 = scmp.ne.s32.totalorder %s135, %s149
    %p151 = scmp.eq.s32.totalorder %s20, 0
    %p152 = por %p150, %p151
    %s153 = ssub.s32 %s14, %s21
    %p154 = scmp.eq.s32.totalorder %s153, 0
    %s156 = sadd.s32 %s155, 1
    %s157 = scalar_select %p154, %s155, %s156
    %p160 = pneg %p154
    %p161 = scmp.eq.s32.totalorder %s14, 1
    %p162 = por %p160, %p161
    %p163 = scmp.ne.s32.totalorder %s155, %s158
    %p164 = scmp.eq.s32.totalorder %s14, 0
    %p165 = por %p163, %p164
    %p166 = scmp.ne.s32.totalorder %s155, %s158
    %p167 = scmp.eq.s32.totalorder %s19, 1
    %p168 = por %p166, %p167
    %p169 = scmp.ne.s32.totalorder %s158, %s159
    %p170 = scmp.eq.s32.totalorder %s19, 0
    %p171 = por %p169, %p170
    %p172 = scmp.ne.s32.totalorder %s158, %s159
    %p173 = scmp.eq.s32.totalorder %s20, 1
    %p174 = por %p172, %p173
    %p176 = scmp.ne.s32.totalorder %s159, %s175
    %p177 = scmp.eq.s32.totalorder %s20, 0
    %p178 = por %p176, %p177
    %s179 = ssub.s32 %s14, %s21
    %p180 = scmp.eq.s32.totalorder %s179, 0
    %s182 = sadd.s32 %s181, 1
    %s183 = scalar_select %p180, %s181, %s182
    %p186 = pneg %p180
    %p187 = scmp.eq.s32.totalorder %s14, 1
    %p188 = por %p186, %p187
    %p189 = scmp.ne.s32.totalorder %s181, %s184
    %p190 = scmp.eq.s32.totalorder %s14, 0
    %p191 = por %p189, %p190
    %p192 = scmp.ne.s32.totalorder %s181, %s184
    %p193 = scmp.eq.s32.totalorder %s19, 1
    %p194 = por %p192, %p193
    %p195 = scmp.ne.s32.totalorder %s184, %s185
    %p196 = scmp.eq.s32.totalorder %s19, 0
    %p197 = por %p195, %p196
    %p198 = scmp.ne.s32.totalorder %s184, %s185
    %p199 = scmp.eq.s32.totalorder %s20, 1
    %p200 = por %p198, %p199
    %p202 = scmp.ne.s32.totalorder %s185, %s201
    %p203 = scmp.eq.s32.totalorder %s20, 0
    %p204 = por %p202, %p203
    %p205 = scmp.le.s32.totalorder 1, %s14
    %p206 = scmp.lt.s32.totalorder %s14, 3
    %p207 = pnand %p205, %p206
    %p208 = pneg %p207
    // Predicated region
    $region9: #{conv_block_pallas.4} parent=5 // pred_check
      _
    $region10: #{conv_block_pallas.4} parent=5 // pred_check_branch
      %210 = sbr.rel (%p207) target = $region12
    $region11: #{conv_block_pallas.4} parent=5 // pred_region
      %s211 = ssub.s32 %s14, 1
      // Predicated region
      $region13: #{conv_block_pallas.4} parent=11 // pred_check
        %p212 = pneg %p61
      $region14: #{conv_block_pallas.4} parent=11 // pred_check_branch
        %214 = sbr.rel (%p212) target = $region16
      $region15: #{conv_block_pallas.4} parent=11 // pred_region
        _
      $region16: #{conv_block_pallas.4} parent=11 // pred_fallthru
        _
      // Predicated region
      $region17: #{conv_block_pallas.4} parent=11 // pred_check
        %p215 = pneg %p82
      $region18: #{conv_block_pallas.4} parent=11 // pred_check_branch
        %217 = sbr.rel (%p215) target = $region20
      $region19: #{conv_block_pallas.4} parent=11 // pred_region
        _
      $region20: #{conv_block_pallas.4} parent=11 // pred_fallthru
        _
      // Predicated region
      $region21: #{conv_block_pallas.4} parent=11 // pred_check
        %p218 = pneg %p103
      $region22: #{conv_block_pallas.4} parent=11 // pred_check_branch
        %220 = sbr.rel (%p218) target = $region24
      $region23: #{conv_block_pallas.4} parent=11 // pred_region
        _
      $region24: #{conv_block_pallas.4} parent=11 // pred_fallthru
        _
      // Predicated region
      $region25: #{conv_block_pallas.4} parent=11 // pred_check
        %p221 = pneg %p124
      $region26: #{conv_block_pallas.4} parent=11 // pred_check_branch
        %223 = sbr.rel (%p221) target = $region28
      $region27: #{conv_block_pallas.4} parent=11 // pred_region
        _
      $region28: #{conv_block_pallas.4} parent=11 // pred_fallthru
        _
      // Predicated region
      $region29: #{conv_block_pallas.4} parent=11 // pred_check
        %p224 = pneg %p145
      $region30: #{conv_block_pallas.4} parent=11 // pred_check_branch
        %226 = sbr.rel (%p224) target = $region32
      $region31: #{conv_block_pallas.4} parent=11 // pred_region
        _
      $region32: #{conv_block_pallas.4} parent=11 // pred_fallthru
        _
    $region12: #{conv_block_pallas.4} parent=5 // pred_fallthru
      _
    %p227 = scmp.lt.s32.totalorder %s14, 2
    // Predicated region
    $region33: #{conv_block_pallas.4} parent=5 // pred_check
      %p228 = pneg %p227
    $region34: #{conv_block_pallas.4} parent=5 // pred_check_branch
      %230 = sbr.rel (%p228) target = $region36
    $region35: #{conv_block_pallas.4} parent=5 // pred_region
      // Predicated region
      $region37: #{conv_block_pallas.4} parent=35 // pred_check
        %p231 = pneg %p34
      $region38: #{conv_block_pallas.4} parent=35 // pred_check_branch
        %233 = sbr.rel (%p231) target = $region40
      $region39: #{conv_block_pallas.4} parent=35 // pred_region
        %p234 = scmp.lt.s32.totalorder %s14, 1
        %s235 = scalar_select %p234, %s14, 1
        %s236 = smul.addr %s235, 2
        %s237 = smul.addr %s236, 8
        %s238 = scalar_lea.vmem %s0, %s237
      $region40: #{conv_block_pallas.4} parent=35 // pred_fallthru
        _
    $region36: #{conv_block_pallas.4} parent=5 // pred_fallthru
      _
    %p239 = scmp.le.s32.totalorder 1, %s14
    %p240 = scmp.lt.s32.totalorder %s14, 3
    %p241 = pnand %p239, %p240
    %p242 = pneg %p241
    // Predicated region
    $region41: #{conv_block_pallas.4} parent=5 // pred_check
      _
    $region42: #{conv_block_pallas.4} parent=5 // pred_check_branch
      %244 = sbr.rel (%p241) target = $region44
    $region43: #{conv_block_pallas.4} parent=5 // pred_region
      %s245 = ssub.s32 %s14, 1
      %p246 = scmp.lt.s32.totalorder %s19, 1
      %s247 = scalar_select %p246, %s19, 1
      %s248 = smul.addr %s247, 2
      %s249 = smul.addr %s248, 8
      %s250 = scalar_lea.vmem %s0, %s249
      %p251 = pneg %p40
      %p252 = pneg %p37
      %p253 = pneg %p61
      %p254 = pneg %p58
      %p255 = pneg %p82
      %p256 = pneg %p79
      %p257 = pneg %p103
      %p258 = pneg %p100
      %p259 = pneg %p124
      %p260 = pneg %p121
      %p261 = pneg %p145
      %p262 = pneg %p142
      %p263 = pneg %p171
      %p264 = pneg %p168
      %p265 = scmp.lt.s32.totalorder %s19, 1
      %s266 = scalar_select %p265, %s19, 1
      %s267 = smul.addr %s266, 2
      %s268 = smul.addr %s267, 8
      %s269 = scalar_lea.vmem %s6, %s268
      %p270 = pneg %p197
      %p271 = pneg %p194
      %p272 = scmp.lt.s32.totalorder %s19, 1
      %s273 = scalar_select %p272, %s19, 1
      %s274 = smul.addr %s273, 2
      %s275 = scalar_lea.vmem %s7, %s274
      %p276 = scmp.lt.s32.totalorder %s19, 1
      %s277 = scalar_select %p276, %s19, 1
      %s278 = smul.addr %s277, 2
      %s279 = smul.addr %s278, 8
      %s280 = scalar_lea.vmem %s0, %s279
      %p281 = scmp.lt.s32.totalorder %s19, 1
      %s282 = scalar_select %p281, %s19, 1
      %s283 = smul.addr %s282, 2
      %s284 = smul.addr %s283, 8
      %s285 = scalar_lea.vmem %s6, %s284
      %p286 = scmp.lt.s32.totalorder %s19, 1
      %s287 = scalar_select %p286, %s19, 1
      %s288 = smul.addr %s287, 2
      %s289 = scalar_lea.vmem %s7, %s288
      %v290 = vld [vmem:[%s280] sm:$0xff]
      %v291 = vld [vmem:[%s280 + $0x8] sm:$0xff]
      %v292 = vld [vmem:[%s1] sm:$0x3]
      %v293 = vmul.f32 %v292, 0.03125
      %v294 = vmul.f32 %v293, %v293
      %v296 = vrot.slane %v294, 7
      %v298 = vsub.f32 %v293, %v296
      %v299 = vadd.f32 %v298, 1e-05
      %v300 = vrsqrt.pop %v299
      %v301 = vmul.f32 %v300, %v299
      %v302 = vmul.f32 %v301, %v300
      %v303 = vmul.f32 0.5, %v302
      %v304 = vsub.f32 1.5, %v303
      %v305 = vmul.f32 %v300, %v304
      %vm306 = vweird.f32 %v299
      %vm307 = vweird.f32 %v300
      %vm308 = vmor %vm306, %vm307
      %v309 = vsel %vm308, %v300, %v305
      %v310 = vld [vmem:[%s4] sm:$0x1]
      %v312 = vperm.slane %v310, 0
      %v314 = vmul.f32 %v309, %v312
      %v315 = vperm.slane %v293, 0
      %v316 = vsub.f32 %v290, %v315
      %v317 = vsub.f32 %v291, %v315
      %v318 = vperm.slane %v314, 1
      %v319 = vmul.f32 %v316, %v318
      %v320 = vmul.f32 %v317, %v318
      %v321 = vld [vmem:[%s5] sm:$0x1]
      %v323 = vperm.slane %v321, 0
      %v325 = vadd.f32 %v319, %v323
      %v326 = vadd.f32 %v320, %v323
      %v327 = vmax.f32 %v325, 0.0
      %v328 = vmax.f32 %v326, 0.0
      %vm331 = vcmask 1040384
      %v332 = vrot.slane %v327, 7
      %v333 = vrot.slane %v328, 7
      %v334 = vsel %vm331, %v332, %v333
      %v338 = vsel %vm331, 0.0, %v332
      %v339 = vsel %vm331, %v333, 0.0
      %v340 = vpack.c.bf16 %v334, %v338
      %v341 = vld [vmem:[%s2] sm:$0xf]
      %v342 = vld [vmem:[%s2 + $0x4] sm:$0xf]
      %v343 = vld [vmem:[%s2 + $0x8] sm:$0xf]
      %v344 = vld [vmem:[%s2 + $0xc] sm:$0xf]
      %v345 = vld [vmem:[%s2 + $0x10] sm:$0xf]
      %v346 = vld [vmem:[%s2 + $0x14] sm:$0xf]
      %v347 = vld [vmem:[%s2 + $0x18] sm:$0xf]
      %v348 = vld [vmem:[%s2 + $0x1c] sm:$0xf]
      %v349 = vld [vmem:[%s2 + $0x20] sm:$0xf]
      %v350 = vld [vmem:[%s2 + $0x24] sm:$0xf]
      %v351 = vld [vmem:[%s2 + $0x28] sm:$0xf]
      %v352 = vld [vmem:[%s2 + $0x2c] sm:$0xf]
      %v353 = vld [vmem:[%s2 + $0x30] sm:$0xf]
      %v354 = vld [vmem:[%s2 + $0x34] sm:$0xf]
      %v355 = vld [vmem:[%s2 + $0x38] sm:$0xf]
      %v356 = vld [vmem:[%s2 + $0x3c] sm:$0xf]
      %v357 = vpack.c.bf16 %v339, %v339
      %s358 = scalar_lea.vmem %s2, 64
      %v359 = vld [vmem:[%s358] sm:$0xf]
      %v360 = vld [vmem:[%s358 + $0x4] sm:$0xf]
      %v361 = vld [vmem:[%s358 + $0x8] sm:$0xf]
      %v362 = vld [vmem:[%s358 + $0xc] sm:$0xf]
      %v363 = vld [vmem:[%s358 + $0x10] sm:$0xf]
      %v364 = vld [vmem:[%s358 + $0x14] sm:$0xf]
      %v365 = vld [vmem:[%s358 + $0x18] sm:$0xf]
      %v366 = vld [vmem:[%s358 + $0x1c] sm:$0xf]
      %v367 = vld [vmem:[%s358 + $0x20] sm:$0xf]
      %v368 = vld [vmem:[%s358 + $0x24] sm:$0xf]
      %v369 = vld [vmem:[%s358 + $0x28] sm:$0xf]
      %v370 = vld [vmem:[%s358 + $0x2c] sm:$0xf]
      %v371 = vld [vmem:[%s358 + $0x30] sm:$0xf]
      %v372 = vld [vmem:[%s358 + $0x34] sm:$0xf]
      %v373 = vld [vmem:[%s358 + $0x38] sm:$0xf]
      %v374 = vld [vmem:[%s358 + $0x3c] sm:$0xf]
      %vm375 = vsmask.f32 7424
      %v377 = vshrl.u32 %v340, 16
      %v379 = vshll.u32 %v340, 16
      %v381 = vrot.slane %v379, 1
      %v382 = vor.u32 %v377, %v381
      %v384 = vshll.u32 %v357, 16
      %v386 = vrot.slane %v384, 1
      %v387 = vsel %vm375, %v382, %v386
      %v405 = vunpack.c.l.b16 %v359
      %v406 = vunpack.c.l.b16 %v360
      %v407 = vunpack.c.l.b16 %v361
      %v408 = vunpack.c.l.b16 %v362
      %v409 = vunpack.c.l.b16 %v363
      %v410 = vunpack.c.l.b16 %v364
      %v411 = vunpack.c.l.b16 %v365
      %v412 = vunpack.c.l.b16 %v366
      %v413 = vunpack.c.l.b16 %v367
      %v414 = vunpack.c.l.b16 %v368
      %v415 = vunpack.c.l.b16 %v369
      %v416 = vunpack.c.l.b16 %v370
      %v417 = vunpack.c.l.b16 %v371
      %v418 = vunpack.c.l.b16 %v372
      %v419 = vunpack.c.l.b16 %v373
      %v420 = vunpack.c.l.b16 %v374
      %v421 = vpack.c.b16 %v406, %v405
      %v422 = vpack.c.b16 %v408, %v407
      %v423 = vpack.c.b16 %v410, %v409
      %v424 = vpack.c.b16 %v412, %v411
      %v425 = vpack.c.b16 %v414, %v413
      %v426 = vpack.c.b16 %v416, %v415
      %v427 = vpack.c.b16 %v418, %v417
      %v428 = vpack.c.b16 %v420, %v419
      %437 = vmatpush.bf16.msra.mxu0 %v428
      %438 = vmatpush.bf16.msra.mxu0 %v427
      %439 = vmatpush.bf16.msra.mxu0 %v426
      %440 = vmatpush.bf16.msra.mxu0 %v425
      %441 = vmatpush.bf16.msra.mxu0 %v424
      %442 = vmatpush.bf16.msra.mxu0 %v423
      %443 = vmatpush.bf16.msra.mxu0 %v422
      %444 = vmatpush.bf16.msra.mxu0 %v421
      %445 = vmatmul.bf16.gmra.mxu0 %v387
      %v446 = vpop.f32.mrf.mxu0
      %v447 = vadd.f32 0.0, %v446
      %v448 = vpop.f32.mrf.mxu0
      %v449 = vadd.f32 0.0, %v448
      %450 = vdwg.mxu0
      %v467 = vunpack.c.l.b16 %v341
      %v468 = vunpack.c.l.b16 %v342
      %v469 = vunpack.c.l.b16 %v343
      %v470 = vunpack.c.l.b16 %v344
      %v471 = vunpack.c.l.b16 %v345
      %v472 = vunpack.c.l.b16 %v346
      %v473 = vunpack.c.l.b16 %v347
      %v474 = vunpack.c.l.b16 %v348
      %v475 = vunpack.c.l.b16 %v349
      %v476 = vunpack.c.l.b16 %v350
      %v477 = vunpack.c.l.b16 %v351
      %v478 = vunpack.c.l.b16 %v352
      %v479 = vunpack.c.l.b16 %v353
      %v480 = vunpack.c.l.b16 %v354
      %v481 = vunpack.c.l.b16 %v355
      %v482 = vunpack.c.l.b16 %v356
      %v483 = vpack.c.b16 %v468, %v467
      %v484 = vpack.c.b16 %v470, %v469
      %v485 = vpack.c.b16 %v472, %v471
      %v486 = vpack.c.b16 %v474, %v473
      %v487 = vpack.c.b16 %v476, %v475
      %v488 = vpack.c.b16 %v478, %v477
      %v489 = vpack.c.b16 %v480, %v479
      %v490 = vpack.c.b16 %v482, %v481
      %499 = vmatpush.bf16.msra.mxu0 %v490
      %500 = vmatpush.bf16.msra.mxu0 %v489
      %501 = vmatpush.bf16.msra.mxu0 %v488
      %502 = vmatpush.bf16.msra.mxu0 %v487
      %503 = vmatpush.bf16.msra.mxu0 %v486
      %504 = vmatpush.bf16.msra.mxu0 %v485
      %505 = vmatpush.bf16.msra.mxu0 %v484
      %506 = vmatpush.bf16.msra.mxu0 %v483
      %507 = vmatmul.bf16.gmra.mxu0 %v340
      %v508 = vpop.f32.mrf.mxu0
      %v509 = vadd.f32 %v447, %v508
      %v510 = vpop.f32.mrf.mxu0
      %v511 = vadd.f32 %v449, %v510
      %512 = vdwg.mxu0
      %s513 = scalar_lea.vmem %s2, 128
      %v514 = vld [vmem:[%s513] sm:$0xf]
      %v515 = vld [vmem:[%s513 + $0x4] sm:$0xf]
      %v516 = vld [vmem:[%s513 + $0x8] sm:$0xf]
      %v517 = vld [vmem:[%s513 + $0xc] sm:$0xf]
      %v518 = vld [vmem:[%s513 + $0x10] sm:$0xf]
      %v519 = vld [vmem:[%s513 + $0x14] sm:$0xf]
      %v520 = vld [vmem:[%s513 + $0x18] sm:$0xf]
      %v521 = vld [vmem:[%s513 + $0x1c] sm:$0xf]
      %v522 = vld [vmem:[%s513 + $0x20] sm:$0xf]
      %v523 = vld [vmem:[%s513 + $0x24] sm:$0xf]
      %v524 = vld [vmem:[%s513 + $0x28] sm:$0xf]
      %v525 = vld [vmem:[%s513 + $0x2c] sm:$0xf]
      %v526 = vld [vmem:[%s513 + $0x30] sm:$0xf]
      %v527 = vld [vmem:[%s513 + $0x34] sm:$0xf]
      %v528 = vld [vmem:[%s513 + $0x38] sm:$0xf]
      %v529 = vld [vmem:[%s513 + $0x3c] sm:$0xf]
      %vm532 = vcmask 1046528
      %v533 = vrot.slane %v340, 1
      %v534 = vrot.slane %v357, 1
      %v535 = vsel %vm532, %v533, %v534
      %v553 = vunpack.c.l.b16 %v514
      %v554 = vunpack.c.l.b16 %v515
      %v555 = vunpack.c.l.b16 %v516
      %v556 = vunpack.c.l.b16 %v517
      %v557 = vunpack.c.l.b16 %v518
      %v558 = vunpack.c.l.b16 %v519
      %v559 = vunpack.c.l.b16 %v520
      %v560 = vunpack.c.l.b16 %v521
      %v561 = vunpack.c.l.b16 %v522
      %v562 = vunpack.c.l.b16 %v523
      %v563 = vunpack.c.l.b16 %v524
      %v564 = vunpack.c.l.b16 %v525
      %v565 = vunpack.c.l.b16 %v526
      %v566 = vunpack.c.l.b16 %v527
      %v567 = vunpack.c.l.b16 %v528
      %v568 = vunpack.c.l.b16 %v529
      %v569 = vpack.c.b16 %v554, %v553
      %v570 = vpack.c.b16 %v556, %v555
      %v571 = vpack.c.b16 %v558, %v557
      %v572 = vpack.c.b16 %v560, %v559
      %v573 = vpack.c.b16 %v562, %v561
      %v574 = vpack.c.b16 %v564, %v563
      %v575 = vpack.c.b16 %v566, %v565
      %v576 = vpack.c.b16 %v568, %v567
      %585 = vmatpush.bf16.msra.mxu0 %v576
      %586 = vmatpush.bf16.msra.mxu0 %v575
      %587 = vmatpush.bf16.msra.mxu0 %v574
      %588 = vmatpush.bf16.msra.mxu0 %v573
      %589 = vmatpush.bf16.msra.mxu0 %v572
      %590 = vmatpush.bf16.msra.mxu0 %v571
      %591 = vmatpush.bf16.msra.mxu0 %v570
      %592 = vmatpush.bf16.msra.mxu0 %v569
      %593 = vmatmul.bf16.gmra.mxu0 %v535
      %v594 = vpop.f32.mrf.mxu0
      %v595 = vadd.f32 0.0, %v594
      %v596 = vpop.f32.mrf.mxu0
      %v597 = vadd.f32 0.0, %v596
      %598 = vdwg.mxu0
      %v599 = vadd.f32 %v509, %v595
      %v600 = vadd.f32 %v511, %v597
      %v601 = vld [vmem:[%s3] sm:$0x1]
      %v603 = vperm.slane %v601, 0
      %v605 = vadd.f32 %v599, %v603
      %v606 = vadd.f32 %v600, %v603
      %607 = vst [vmem:[%s285] sm:$0xff] %v605
      %608 = vst [vmem:[%s285 + $0x8] sm:$0xff] %v606
      %v609 = vadd.f32 %v605, %v606
      %v610 = vrot.slane %v609, 4
      %v611 = vadd.f32 %v609, %v610
      %v612 = vrot.slane %v611, 2
      %v613 = vadd.f32 %v611, %v612
      %v614 = vrot.slane %v613, 1
      %v615 = vadd.f32 %v613, %v614
      %v616 = vmul.f32 %v605, %v605
      %v617 = vmul.f32 %v606, %v606
      %v618 = vadd.f32 %v616, %v617
      %v619 = vrot.slane %v618, 4
      %v620 = vadd.f32 %v618, %v619
      %v621 = vrot.slane %v620, 2
      %v622 = vadd.f32 %v620, %v621
      %v623 = vrot.slane %v622, 1
      %v624 = vadd.f32 %v622, %v623
      %v625 = vsel %vm331, %v615, %v624
      %626 = vst [vmem:[%s289] sm:$0x3] %v625
      %p627 = scmp.lt.s32.totalorder %s19, 1
      %s628 = scalar_select %p627, %s19, 1
      %s629 = smul.addr %s628, 2
      %s630 = smul.addr %s629, 8
      %s631 = scalar_lea.vmem %s6, %s630
      %p632 = scmp.lt.s32.totalorder %s19, 1
      %s633 = scalar_select %p632, %s19, 1
      %s634 = smul.addr %s633, 2
      %s635 = scalar_lea.vmem %s7, %s634
      // Predicated region
      $region45: #{conv_block_pallas.4} parent=43 // pred_check
        %p636 = pneg %p168
      $region46: #{conv_block_pallas.4} parent=43 // pred_check_branch
        %638 = sbr.rel (%p636) target = $region48
      $region47: #{conv_block_pallas.4} parent=43 // pred_region
        _
      $region48: #{conv_block_pallas.4} parent=43 // pred_fallthru
        _
      // Predicated region
      $region49: #{conv_block_pallas.4} parent=43 // pred_check
        %p639 = pneg %p194
      $region50: #{conv_block_pallas.4} parent=43 // pred_check_branch
        %641 = sbr.rel (%p639) target = $region52
      $region51: #{conv_block_pallas.4} parent=43 // pred_region
        _
      $region52: #{conv_block_pallas.4} parent=43 // pred_fallthru
        _
    $region44: #{conv_block_pallas.4} parent=5 // pred_fallthru
      _
    %p642 = scmp.le.s32.totalorder 2, %s14
    // Predicated region
    $region53: #{conv_block_pallas.4} parent=5 // pred_check
      %p643 = pneg %p642
    $region54: #{conv_block_pallas.4} parent=5 // pred_check_branch
      %645 = sbr.rel (%p643) target = $region56
    $region55: #{conv_block_pallas.4} parent=5 // pred_region
      %s646 = ssub.s32 %s14, 2
      // Predicated region
      $region57: #{conv_block_pallas.4} parent=55 // pred_check
        %p647 = pneg %p174
      $region58: #{conv_block_pallas.4} parent=55 // pred_check_branch
        %649 = sbr.rel (%p647) target = $region60
      $region59: #{conv_block_pallas.4} parent=55 // pred_region
        %p650 = scmp.lt.s32.totalorder %s20, 1
        %s651 = scalar_select %p650, %s20, 1
        %s652 = smul.addr %s651, 2
        %s653 = smul.addr %s652, 8
        %s654 = scalar_lea.vmem %s6, %s653
      $region60: #{conv_block_pallas.4} parent=55 // pred_fallthru
        _
      // Predicated region
      $region61: #{conv_block_pallas.4} parent=55 // pred_check
        %p655 = pneg %p200
      $region62: #{conv_block_pallas.4} parent=55 // pred_check_branch
        %657 = sbr.rel (%p655) target = $region64
      $region63: #{conv_block_pallas.4} parent=55 // pred_region
        %p658 = scmp.lt.s32.totalorder %s20, 1
        %s659 = scalar_select %p658, %s20, 1
        %s660 = smul.addr %s659, 2
        %s661 = scalar_lea.vmem %s7, %s660
      $region64: #{conv_block_pallas.4} parent=55 // pred_fallthru
        _
    $region56: #{conv_block_pallas.4} parent=5 // pred_fallthru
      _
  $region6: #{conv_block_pallas.4} parent=0 // loop_footer
    %s18 = sadd.s32 1, %s14
  $region7: #{conv_block_pallas.4} parent=0 // loop_footer_branch
    %13 = sbr.rel target = $region3
  $region8: #{conv_block_pallas.4} parent=0 // loop_exit
    _

</llo_original>
